<compile_context>
chip_gen: v7x
topology: tpu7x:2x2x1
jax: 0.10.0
libtpu: 0.0.40
codegen_flags: <defaults>
</compile_context>

<pallas_src>
import jax
import jax.numpy as jnp
from jax.experimental import pallas as pl
from jax.experimental.pallas import tpu as pltpu

BOND_FEATURE_DIMS = (5, 6, 2)
COMBO_SLOT = 64  # 5*6*2 = 60 combinations, padded to 64 table rows


def _round_up(x, m):
    return ((x + m - 1) // m) * m


def bond_encoder_kernel(idx_ref, tbl_ref, out_ref):
    # idx_ref: (rows, g)  int32 -- combined bond-feature index per packed edge
    # tbl_ref: (64, H_pad) f32  -- combined product embedding table
    # out_ref: (rows, g*H_pad) f32
    rows, g = idx_ref.shape
    K, Hp = tbl_ref.shape
    tbl = tbl_ref[...]

    # Row-chunking: keep one-hot slabs small (near vreg-resident) instead of
    # materializing the whole tile's one-hot in VMEM.
    chunk = 256 if (rows % 256 == 0) else rows
    n_chunks = rows // chunk

    # Hoisted iota (JAX does not CSE broadcast_in_dim inside loops).
    iota = jax.lax.broadcasted_iota(jnp.int32, (chunk, K), 1)

    for c in range(n_chunks):  # small, static trip count
        r0 = c * chunk
        idx_c = idx_ref[pl.ds(r0, chunk), :]  # (chunk, g) int32
        outs = []
        for j in range(g):
            onehot = (iota == idx_c[:, j:j + 1]).astype(jnp.float32)
            outs.append(
                jnp.dot(
                    onehot,
                    tbl,
                    preferred_element_type=jnp.float32,
                    precision=jax.lax.Precision.HIGHEST,
                )
            )
        res = outs[0] if g == 1 else jnp.concatenate(outs, axis=-1)
        out_ref[pl.ds(r0, chunk), :] = res


def _build_combined_table(w0, w1, w2, h_pad):
    """(5,H)+(6,H)+(2,H) -> (64,H_pad) product table; row = i0*12 + i1*2 + i2."""
    d0, d1, d2 = w0.shape[0], w1.shape[0], w2.shape[0]
    H = w0.shape[1]
    T = w0[:, None, None, :] + w1[None, :, None, :] + w2[None, None, :, :]
    T = T.reshape(d0 * d1 * d2, H)  # (60, H), same add order as the reference
    return jnp.pad(T, ((0, COMBO_SLOT - d0 * d1 * d2), (0, h_pad - H)))


def bond_encoder(edge_attr, emb_list, *, block_rows=2048):
    """edge_attr: int [..., 3]; emb_list: [(5,H),(6,H),(2,H)] f32 -> [..., H] f32."""
    *lead, F = edge_attr.shape
    assert F == len(BOND_FEATURE_DIMS)
    H = emb_list[0].shape[1]
    E = 1
    for d in lead:
        E *= d
    flat = edge_attr.reshape(E, F)

    # Lane-dense output layout: pad H to a divisor of 128 (or a multiple of
    # 128) and pack g = 128 // H_pad edges per output row.
    if H >= 128:
        H_pad = _round_up(H, 128)
        g = 1
    else:
        H_pad = 8
        while H_pad < H:
            H_pad *= 2
        g = 128 // H_pad

    T = _build_combined_table(*emb_list, h_pad=H_pad)  # (64, H_pad)

    # Combined per-edge index matching the product-table row ordering.
    d1, d2 = BOND_FEATURE_DIMS[1], BOND_FEATURE_DIMS[2]
    idx = (flat[:, 0] * (d1 * d2) + flat[:, 1] * d2 + flat[:, 2]).astype(jnp.int32)

    rows = pl.cdiv(E, g)
    if rows > block_rows:
        block_rows = _round_up(block_rows, 256)   # in-kernel 256-row chunks
    else:
        # Small problem: split into >=2 grid steps so both v7x TensorCores
        # get work via dimension_semantics=("parallel",).
        block_rows = max(8, _round_up(pl.cdiv(rows, 2), 8))
    rows_pad = _round_up(rows, block_rows)

    # Padded edges hit combo row 0 and are sliced off after the call.
    idx = jnp.pad(idx, (0, rows_pad * g - E)).reshape(rows_pad, g)

    out = pl.pallas_call(
        bond_encoder_kernel,
        out_shape=jax.ShapeDtypeStruct((rows_pad, g * H_pad), jnp.float32),
        grid_spec=pltpu.PrefetchScalarGridSpec(
            num_scalar_prefetch=0,
            grid=(rows_pad // block_rows,),
            in_specs=[
                pl.BlockSpec((block_rows, g), lambda i: (i, 0)),
                pl.BlockSpec((COMBO_SLOT, H_pad), lambda i: (0, 0)),
            ],
            out_specs=pl.BlockSpec((block_rows, g * H_pad), lambda i: (i, 0)),
        ),
        compiler_params=pltpu.CompilerParams(
            dimension_semantics=("parallel",)
        ),
    )(idx, T)

    # Free (outside-kernel) view back to one embedding row per edge.
    out = out.reshape(rows_pad * g, H_pad)[:E, :H]
    return out.reshape(*lead, H)


def init_bond_encoder_params(key, hidden_channels):
    """Synthetic init mirroring nn.Embedding.reset_parameters (std normal)."""
    tables = []
    for i, dim in enumerate(BOND_FEATURE_DIMS):
        k = jax.random.fold_in(key, i)
        tables.append(
            jax.random.normal(k, (dim, hidden_channels), dtype=jnp.float32)
        )
    return tables


if __name__ == "__main__":
    key = jax.random.PRNGKey(0)
    hidden_channels = 32
    num_edges = 16

    k_emb, k_idx = jax.random.split(key)
    emb_list = init_bond_encoder_params(k_emb, hidden_channels)

    # edge_attr[..., i] in [0, BOND_FEATURE_DIMS[i])
    cols = []
    for i, dim in enumerate(BOND_FEATURE_DIMS):
        ki = jax.random.fold_in(k_idx, i)
        cols.append(
            jax.random.randint(ki, (num_edges,), 0, dim, dtype=jnp.int32)
        )
    edge_attr = jnp.stack(cols, axis=-1)  # (E, 3) int32

    out = bond_encoder(edge_attr, emb_list)
    out = jax.block_until_ready(out)

    # Pure-JAX reference: sum of the three embedding lookups.
    ref = sum(
        jnp.take(emb_list[i], edge_attr[:, i], axis=0)
        for i in range(len(BOND_FEATURE_DIMS))
    )
    assert out.shape == (num_edges, hidden_channels)
    assert jnp.allclose(out, ref, atol=1e-5, rtol=1e-5)

    print("KERNEL_OK")
</pallas_src>

<mosaic_0001>
module attributes {stable_mosaic.version = 11 : i64} {
  func.func @bond_encoder_kernel(%arg0: i32, %arg1: memref<8x4xi32, #tpu.memory_space<vmem>>, %arg2: memref<64x32xf32, #tpu.memory_space<vmem>>, %arg3: memref<8x128xf32, #tpu.memory_space<vmem>>) attributes {dimension_semantics = [#tpu.dimension_semantics<parallel>], iteration_bounds = array<i64: 1>, scalar_prefetch = 0 : i64, scratch_operands = 0 : i64, tpu.core_type = #tpu.core_type<tc>, window_params = [{transform_indices = @transform_0, window_bounds = array<i64: 8, 4>}, {pipeline_mode = #tpu.pipeline_mode<synchronous>, transform_indices = @transform_1, window_bounds = array<i64: 64, 32>}, {transform_indices = @transform_2, window_bounds = array<i64: 8, 128>}]} {
    %c0 = arith.constant 0 : index
    %c0_0 = arith.constant 0 : index
    %0 = vector.load %arg2[%c0, %c0_0] : memref<64x32xf32, #tpu.memory_space<vmem>>, vector<64x32xf32>
    %1 = tpu.iota {dimensions = array<i32: 1>} : vector<8x64xi32>
    %c0_1 = arith.constant 0 : index
    %c0_2 = arith.constant 0 : index
    %2 = vector.load %arg1[%c0_1, %c0_2] : memref<8x4xi32, #tpu.memory_space<vmem>>, vector<8x4xi32>
    %3 = vector.extract_strided_slice %2 {offsets = [0, 0], sizes = [8, 1], strides = [1, 1]} : vector<8x4xi32> to vector<8x1xi32>
    %4 = vector.broadcast %3 : vector<8x1xi32> to vector<8x64xi32>
    %5 = arith.cmpi eq, %1, %4 : vector<8x64xi32>
    %6 = arith.extui %5 : vector<8x64xi1> to vector<8x64xi32>
    %7 = arith.sitofp %6 : vector<8x64xi32> to vector<8x64xf32>
    %cst = arith.constant dense<0.000000e+00> : vector<8x32xf32>
    %8 = tpu.matmul %7, %0, %cst {dimension_numbers = #tpu.dot_dimension_numbers<[1], [0], [0], [1], [0, 0, 1, 1], [], []>, precision = #tpu.contract_precision<fp32>} : vector<8x64xf32>, vector<64x32xf32>, vector<8x32xf32> -> vector<8x32xf32>
    %9 = vector.extract_strided_slice %2 {offsets = [0, 1], sizes = [8, 1], strides = [1, 1]} : vector<8x4xi32> to vector<8x1xi32>
    %10 = vector.broadcast %9 : vector<8x1xi32> to vector<8x64xi32>
    %11 = arith.cmpi eq, %1, %10 : vector<8x64xi32>
    %12 = arith.extui %11 : vector<8x64xi1> to vector<8x64xi32>
    %13 = arith.sitofp %12 : vector<8x64xi32> to vector<8x64xf32>
    %cst_3 = arith.constant dense<0.000000e+00> : vector<8x32xf32>
    %14 = tpu.matmul %13, %0, %cst_3 {dimension_numbers = #tpu.dot_dimension_numbers<[1], [0], [0], [1], [0, 0, 1, 1], [], []>, precision = #tpu.contract_precision<fp32>} : vector<8x64xf32>, vector<64x32xf32>, vector<8x32xf32> -> vector<8x32xf32>
    %15 = vector.extract_strided_slice %2 {offsets = [0, 2], sizes = [8, 1], strides = [1, 1]} : vector<8x4xi32> to vector<8x1xi32>
    %16 = vector.broadcast %15 : vector<8x1xi32> to vector<8x64xi32>
    %17 = arith.cmpi eq, %1, %16 : vector<8x64xi32>
    %18 = arith.extui %17 : vector<8x64xi1> to vector<8x64xi32>
    %19 = arith.sitofp %18 : vector<8x64xi32> to vector<8x64xf32>
    %cst_4 = arith.constant dense<0.000000e+00> : vector<8x32xf32>
    %20 = tpu.matmul %19, %0, %cst_4 {dimension_numbers = #tpu.dot_dimension_numbers<[1], [0], [0], [1], [0, 0, 1, 1], [], []>, precision = #tpu.contract_precision<fp32>} : vector<8x64xf32>, vector<64x32xf32>, vector<8x32xf32> -> vector<8x32xf32>
    %21 = vector.extract_strided_slice %2 {offsets = [0, 3], sizes = [8, 1], strides = [1, 1]} : vector<8x4xi32> to vector<8x1xi32>
    %22 = vector.broadcast %21 : vector<8x1xi32> to vector<8x64xi32>
    %23 = arith.cmpi eq, %1, %22 : vector<8x64xi32>
    %24 = arith.extui %23 : vector<8x64xi1> to vector<8x64xi32>
    %25 = arith.sitofp %24 : vector<8x64xi32> to vector<8x64xf32>
    %cst_5 = arith.constant dense<0.000000e+00> : vector<8x32xf32>
    %26 = tpu.matmul %25, %0, %cst_5 {dimension_numbers = #tpu.dot_dimension_numbers<[1], [0], [0], [1], [0, 0, 1, 1], [], []>, precision = #tpu.contract_precision<fp32>} : vector<8x64xf32>, vector<64x32xf32>, vector<8x32xf32> -> vector<8x32xf32>
    %27 = tpu.concatenate %8, %14, %20, %26 in 1 : vector<8x32xf32>, vector<8x32xf32>, vector<8x32xf32>, vector<8x32xf32> -> vector<8x128xf32>
    %c0_6 = arith.constant 0 : index
    %c0_7 = arith.constant 0 : index
    %28 = vector.load %arg3[%c0_6, %c0_7] : memref<8x128xf32, #tpu.memory_space<vmem>>, vector<8x128xf32>
    tpu.vector_store %arg3[%c0_6, %c0_7], %27 {strides = array<i32>} : memref<8x128xf32, #tpu.memory_space<vmem>>, vector<8x128xf32>,
    return
  }
  func.func @transform_0(%arg0: i32) -> (i32, i32) {
    %c0_i32 = arith.constant 0 : i32
    %c0_i32_0 = arith.constant 0 : i32
    return %arg0, %c0_i32 : i32, i32
  }
  func.func @transform_1(%arg0: i32) -> (i32, i32) {
    %c0_i32 = arith.constant 0 : i32
    %c0_i32_0 = arith.constant 0 : i32
    %c0_i32_1 = arith.constant 0 : i32
    return %c0_i32, %c0_i32_0 : i32, i32
  }
  func.func @transform_2(%arg0: i32) -> (i32, i32) {
    %c0_i32 = arith.constant 0 : i32
    %c0_i32_0 = arith.constant 0 : i32
    return %arg0, %c0_i32 : i32, i32
  }
}

</mosaic_0001>

<llo_original>
// kernel: tpu_custom_call.1
$region0: #{tpu_custom_call.1}
  #allocation0 [shape = 'u32[]', space=smem, size = 0x4, offset = 0x4, fixed_abs, tag = 'smem constant byte address 0x4 - core index']
  #allocation1 [shape = 'u32[144,128]{1,0:T(1,128)}', space=vmem, size = 0x12000, scoped, tag = 'internal scratch']
  %s0 = inlined_call_operand.vmem [shape: s32[8,4], index: 0, kind: input, shape index: {}]
  %s1 = inlined_call_operand.vmem [shape: f32[64,32], index: 1, kind: input, shape index: {}]
  %s2 = inlined_call_operand.hbm [shape: f32[8,128], index: 2, kind: output, shape index: {}]
  %s3 = sld [smem:[#allocation0]]
  $region18: #{tpu_custom_call.1} parent=0
    _
  %s5 = ssub.s32 1, %s3
  %s6 = scalar_select 0, %s5, %s3
  $region1: #{tpu_custom_call.1} parent=0
    #allocation2 [shape = 'u8[4096]{0}', space=vmem, size = 0x1000, scoped, tag = 'output window, operand 0, single buffered']
    #allocation3 [shape = 's32[1]{0}', space=sflag, size = 0x4, scoped, tag = 'scoped memory for tpu_custom_call.1']
    %7 = vsyncpa [#allocation3], 0
    // Predicated region
    $region2: #{tpu_custom_call.1} parent=1 // pred_check
      _
    $region3: #{tpu_custom_call.1} parent=1 // pred_check_branch
      %9 = sbr.rel (0) target = $region5
    $region4: #{tpu_custom_call.1} parent=1 // pred_region
      _
    $region5: #{tpu_custom_call.1} parent=1 // pred_fallthru
      _
    // Predicated region
    $region6: #{tpu_custom_call.1} parent=1 // pred_check
      _
    $region7: #{tpu_custom_call.1} parent=1 // pred_check_branch
      %11 = sbr.rel (0) target = $region9
    $region8: #{tpu_custom_call.1} parent=1 // pred_region
      _
    $region9: #{tpu_custom_call.1} parent=1 // pred_fallthru
      _
    %v12 = vld [vmem:[%s1] sm:$0xff]
    %v13 = vld [vmem:[%s1 + $0x8] sm:$0xff]
    %v14 = vld [vmem:[%s1 + $0x10] sm:$0xff]
    %v15 = vld [vmem:[%s1 + $0x18] sm:$0xff]
    %v16 = vld [vmem:[%s1 + $0x20] sm:$0xff]
    %v17 = vld [vmem:[%s1 + $0x28] sm:$0xff]
    %v18 = vld [vmem:[%s1 + $0x30] sm:$0xff]
    %v19 = vld [vmem:[%s1 + $0x38] sm:$0xff]
    %v20 = vlaneseq
    %v21 = vand.u32 %v20, 127
    %v22 = vld [vmem:[%s0] sm:$0xff]
    %23 = vset.pattern.permute.xlu0 0
    %24 = vperm.xlu0 %23, %v22
    %v25 = vpop.permute.xlu0 %24
    %vm26 = vcmp.eq.s32.totalorder %v21, %v25
    %v27 = vsel %vm26, 1, 0
    %v28 = vcvt.s32.f32 %v27
    %vm29 = vcmask 523264
    %v31 = vsel %vm29, %v28, 0
    %33 = vmatprep.subr.mxu0 0.0
    %v34 = vand.u32 %v12, 4294901760
    %35 = vmatpush1.msra.mxu0 %v34
    %36 = vmatprep.subr.mxu0 0.0
    %v37 = vand.u32 %v13, 4294901760
    %38 = vmatpush1.msra.mxu0 %v37
    %39 = vmatprep.subr.mxu0 0.0
    %v40 = vand.u32 %v14, 4294901760
    %41 = vmatpush1.msra.mxu0 %v40
    %42 = vmatprep.subr.mxu0 0.0
    %v43 = vand.u32 %v15, 4294901760
    %44 = vmatpush1.msra.mxu0 %v43
    %45 = vmatprep.subr.mxu0 0.0
    %v46 = vand.u32 %v16, 4294901760
    %47 = vmatpush1.msra.mxu0 %v46
    %48 = vmatprep.subr.mxu0 0.0
    %v49 = vand.u32 %v17, 4294901760
    %50 = vmatpush1.msra.mxu0 %v49
    %51 = vmatprep.subr.mxu0 0.0
    %v52 = vand.u32 %v18, 4294901760
    %53 = vmatpush1.msra.mxu0 %v52
    %54 = vmatprep.subr.mxu0 0.0
    %v55 = vand.u32 %v19, 4294901760
    %56 = vmatpush1.msra.mxu0 %v55
    %57 = vmatprep.subr.mxu0 0.0
    %58 = vmatpush1.msra.mxu0 0.0
    %59 = vmatprep.subr.mxu0 0.0
    %60 = vmatpush1.msra.mxu0 0.0
    %61 = vmatprep.subr.mxu0 0.0
    %62 = vmatpush1.msra.mxu0 0.0
    %63 = vmatprep.subr.mxu0 0.0
    %64 = vmatpush1.msra.mxu0 0.0
    %65 = vmatprep.subr.mxu0 0.0
    %66 = vmatpush1.msra.mxu0 0.0
    %67 = vmatprep.subr.mxu0 0.0
    %68 = vmatpush1.msra.mxu0 0.0
    %69 = vmatprep.subr.mxu0 0.0
    %70 = vmatpush1.msra.mxu0 0.0
    %71 = vmatprep.subr.mxu0 0.0
    %72 = vmatpush1.msra.mxu0 0.0
    %73 = vmatprep.subr.mxu0 0.0
    %74 = vmatpush1.msra.mxu0 0.0
    %75 = vmatprep.subr.mxu0 0.0
    %76 = vmatpush1.msra.mxu0 0.0
    %77 = vmatprep.subr.mxu0 0.0
    %78 = vmatpush1.msra.mxu0 0.0
    %79 = vmatprep.subr.mxu0 0.0
    %80 = vmatpush1.msra.mxu0 0.0
    %81 = vmatprep.subr.mxu0 0.0
    %82 = vmatpush1.msra.mxu0 0.0
    %83 = vmatprep.subr.mxu0 0.0
    %84 = vmatpush1.msra.mxu0 0.0
    %85 = vmatprep.subr.mxu0 0.0
    %86 = vmatpush1.msra.mxu0 0.0
    %87 = vmatprep.subr.mxu0 0.0
    %88 = vmatpush1.msra.mxu0 0.0
    %89 = vmatprep.subr.mxu0 0.0
    %90 = vmatpush1.msra.mxu0 0.0
    %91 = vmatprep.subr.mxu0 0.0
    %92 = vmatpush1.msra.mxu0 0.0
    %93 = vmatprep.subr.mxu0 0.0
    %94 = vmatpush1.msra.mxu0 0.0
    %95 = vmatprep.subr.mxu0 0.0
    %96 = vmatpush1.msra.mxu0 0.0
    %97 = vmatprep.subr.mxu0 0.0
    %98 = vmatpush1.msra.mxu0 0.0
    %99 = vmatprep.subr.mxu0 0.0
    %100 = vmatpush1.msra.mxu0 0.0
    %101 = vmatprep.subr.mxu0 0.0
    %102 = vmatpush1.msra.mxu0 0.0
    %103 = vmatprep.subr.mxu0 0.0
    %104 = vmatpush1.msra.mxu0 0.0
    %105 = vmatprep.mubr.f32.mxu0 0.0
    %v106 = vand.u32 %v31, 4294901760
    %v107 = vsub.f32 %v31, %v106
    %v108 = vand.u32 %v107, 4294901760
    %v109 = vsub.f32 %v107, %v108
    %v110 = vand.u32 %v109, 4294901760
    %111 = vmatmul.mubr.f32.gmra.mrb[0].mxu0 %v110
    %v112 = vpop.f32.mrb[0].mxu0
    %v113 = vadd.f32 0.0, %v112
    %v114 = vpop.f32.mrb[0].mxu0
    %115 = vdwg.mxu0
    %116 = vmatprep.subr.mxu0 0.0
    %v117 = vand.u32 %v12, 4294901760
    %v118 = vsub.f32 %v12, %v117
    %v119 = vand.u32 %v118, 4294901760
    %v120 = vsub.f32 %v118, %v119
    %v121 = vand.u32 %v120, 4294901760
    %122 = vmatpush1.msra.mxu0 %v121
    %123 = vmatprep.subr.mxu0 0.0
    %v124 = vand.u32 %v13, 4294901760
    %v125 = vsub.f32 %v13, %v124
    %v126 = vand.u32 %v125, 4294901760
    %v127 = vsub.f32 %v125, %v126
    %v128 = vand.u32 %v127, 4294901760
    %129 = vmatpush1.msra.mxu0 %v128
    %130 = vmatprep.subr.mxu0 0.0
    %v131 = vand.u32 %v14, 4294901760
    %v132 = vsub.f32 %v14, %v131
    %v133 = vand.u32 %v132, 4294901760
    %v134 = vsub.f32 %v132, %v133
    %v135 = vand.u32 %v134, 4294901760
    %136 = vmatpush1.msra.mxu0 %v135
    %137 = vmatprep.subr.mxu0 0.0
    %v138 = vand.u32 %v15, 4294901760
    %v139 = vsub.f32 %v15, %v138
    %v140 = vand.u32 %v139, 4294901760
    %v141 = vsub.f32 %v139, %v140
    %v142 = vand.u32 %v141, 4294901760
    %143 = vmatpush1.msra.mxu0 %v142
    %144 = vmatprep.subr.mxu0 0.0
    %v145 = vand.u32 %v16, 4294901760
    %v146 = vsub.f32 %v16, %v145
    %v147 = vand.u32 %v146, 4294901760
    %v148 = vsub.f32 %v146, %v147
    %v149 = vand.u32 %v148, 4294901760
    %150 = vmatpush1.msra.mxu0 %v149
    %151 = vmatprep.subr.mxu0 0.0
    %v152 = vand.u32 %v17, 4294901760
    %v153 = vsub.f32 %v17, %v152
    %v154 = vand.u32 %v153, 4294901760
    %v155 = vsub.f32 %v153, %v154
    %v156 = vand.u32 %v155, 4294901760
    %157 = vmatpush1.msra.mxu0 %v156
    %158 = vmatprep.subr.mxu0 0.0
    %v159 = vand.u32 %v18, 4294901760
    %v160 = vsub.f32 %v18, %v159
    %v161 = vand.u32 %v160, 4294901760
    %v162 = vsub.f32 %v160, %v161
    %v163 = vand.u32 %v162, 4294901760
    %164 = vmatpush1.msra.mxu0 %v163
    %165 = vmatprep.subr.mxu0 0.0
    %v166 = vand.u32 %v19, 4294901760
    %v167 = vsub.f32 %v19, %v166
    %v168 = vand.u32 %v167, 4294901760
    %v169 = vsub.f32 %v167, %v168
    %v170 = vand.u32 %v169, 4294901760
    %171 = vmatpush1.msra.mxu0 %v170
    %172 = vmatprep.subr.mxu0 0.0
    %173 = vmatpush1.msra.mxu0 0.0
    %174 = vmatprep.subr.mxu0 0.0
    %175 = vmatpush1.msra.mxu0 0.0
    %176 = vmatprep.subr.mxu0 0.0
    %177 = vmatpush1.msra.mxu0 0.0
    %178 = vmatprep.subr.mxu0 0.0
    %179 = vmatpush1.msra.mxu0 0.0
    %180 = vmatprep.subr.mxu0 0.0
    %181 = vmatpush1.msra.mxu0 0.0
    %182 = vmatprep.subr.mxu0 0.0
    %183 = vmatpush1.msra.mxu0 0.0
    %184 = vmatprep.subr.mxu0 0.0
    %185 = vmatpush1.msra.mxu0 0.0
    %186 = vmatprep.subr.mxu0 0.0
    %187 = vmatpush1.msra.mxu0 0.0
    %188 = vmatprep.subr.mxu0 0.0
    %189 = vmatpush1.msra.mxu0 0.0
    %190 = vmatprep.subr.mxu0 0.0
    %191 = vmatpush1.msra.mxu0 0.0
    %192 = vmatprep.subr.mxu0 0.0
    %193 = vmatpush1.msra.mxu0 0.0
    %194 = vmatprep.subr.mxu0 0.0
    %195 = vmatpush1.msra.mxu0 0.0
    %196 = vmatprep.subr.mxu0 0.0
    %197 = vmatpush1.msra.mxu0 0.0
    %198 = vmatprep.subr.mxu0 0.0
    %199 = vmatpush1.msra.mxu0 0.0
    %200 = vmatprep.subr.mxu0 0.0
    %201 = vmatpush1.msra.mxu0 0.0
    %202 = vmatprep.subr.mxu0 0.0
    %203 = vmatpush1.msra.mxu0 0.0
    %204 = vmatprep.subr.mxu0 0.0
    %205 = vmatpush1.msra.mxu0 0.0
    %206 = vmatprep.subr.mxu0 0.0
    %207 = vmatpush1.msra.mxu0 0.0
    %208 = vmatprep.subr.mxu0 0.0
    %209 = vmatpush1.msra.mxu0 0.0
    %210 = vmatprep.subr.mxu0 0.0
    %211 = vmatpush1.msra.mxu0 0.0
    %212 = vmatprep.subr.mxu0 0.0
    %213 = vmatpush1.msra.mxu0 0.0
    %214 = vmatprep.subr.mxu0 0.0
    %215 = vmatpush1.msra.mxu0 0.0
    %216 = vmatprep.subr.mxu0 0.0
    %217 = vmatpush1.msra.mxu0 0.0
    %218 = vmatprep.subr.mxu0 0.0
    %219 = vmatpush1.msra.mxu0 0.0
    %220 = vmatprep.mubr.f32.mxu0 0.0
    %v221 = vand.u32 %v31, 4294901760
    %222 = vmatmul.mubr.f32.gmra.mrb[0].mxu0 %v221
    %v223 = vpop.f32.mrb[0].mxu0
    %v224 = vadd.f32 %v113, %v223
    %v225 = vpop.f32.mrb[0].mxu0
    %226 = vdwg.mxu0
    %227 = vmatprep.subr.mxu0 0.0
    %v228 = vand.u32 %v12, 4294901760
    %v229 = vsub.f32 %v12, %v228
    %230 = vmatpush1.msra.mxu0 %v229
    %231 = vmatprep.subr.mxu0 0.0
    %v232 = vand.u32 %v13, 4294901760
    %v233 = vsub.f32 %v13, %v232
    %234 = vmatpush1.msra.mxu0 %v233
    %235 = vmatprep.subr.mxu0 0.0
    %v236 = vand.u32 %v14, 4294901760
    %v237 = vsub.f32 %v14, %v236
    %238 = vmatpush1.msra.mxu0 %v237
    %239 = vmatprep.subr.mxu0 0.0
    %v240 = vand.u32 %v15, 4294901760
    %v241 = vsub.f32 %v15, %v240
    %242 = vmatpush1.msra.mxu0 %v241
    %243 = vmatprep.subr.mxu0 0.0
    %v244 = vand.u32 %v16, 4294901760
    %v245 = vsub.f32 %v16, %v244
    %246 = vmatpush1.msra.mxu0 %v245
    %247 = vmatprep.subr.mxu0 0.0
    %v248 = vand.u32 %v17, 4294901760
    %v249 = vsub.f32 %v17, %v248
    %250 = vmatpush1.msra.mxu0 %v249
    %251 = vmatprep.subr.mxu0 0.0
    %v252 = vand.u32 %v18, 4294901760
    %v253 = vsub.f32 %v18, %v252
    %254 = vmatpush1.msra.mxu0 %v253
    %255 = vmatprep.subr.mxu0 0.0
    %v256 = vand.u32 %v19, 4294901760
    %v257 = vsub.f32 %v19, %v256
    %258 = vmatpush1.msra.mxu0 %v257
    %259 = vmatprep.subr.mxu0 0.0
    %260 = vmatpush1.msra.mxu0 0.0
    %261 = vmatprep.subr.mxu0 0.0
    %262 = vmatpush1.msra.mxu0 0.0
    %263 = vmatprep.subr.mxu0 0.0
    %264 = vmatpush1.msra.mxu0 0.0
    %265 = vmatprep.subr.mxu0 0.0
    %266 = vmatpush1.msra.mxu0 0.0
    %267 = vmatprep.subr.mxu0 0.0
    %268 = vmatpush1.msra.mxu0 0.0
    %269 = vmatprep.subr.mxu0 0.0
    %270 = vmatpush1.msra.mxu0 0.0
    %271 = vmatprep.subr.mxu0 0.0
    %272 = vmatpush1.msra.mxu0 0.0
    %273 = vmatprep.subr.mxu0 0.0
    %274 = vmatpush1.msra.mxu0 0.0
    %275 = vmatprep.subr.mxu0 0.0
    %276 = vmatpush1.msra.mxu0 0.0
    %277 = vmatprep.subr.mxu0 0.0
    %278 = vmatpush1.msra.mxu0 0.0
    %279 = vmatprep.subr.mxu0 0.0
    %280 = vmatpush1.msra.mxu0 0.0
    %281 = vmatprep.subr.mxu0 0.0
    %282 = vmatpush1.msra.mxu0 0.0
    %283 = vmatprep.subr.mxu0 0.0
    %284 = vmatpush1.msra.mxu0 0.0
    %285 = vmatprep.subr.mxu0 0.0
    %286 = vmatpush1.msra.mxu0 0.0
    %287 = vmatprep.subr.mxu0 0.0
    %288 = vmatpush1.msra.mxu0 0.0
    %289 = vmatprep.subr.mxu0 0.0
    %290 = vmatpush1.msra.mxu0 0.0
    %291 = vmatprep.subr.mxu0 0.0
    %292 = vmatpush1.msra.mxu0 0.0
    %293 = vmatprep.subr.mxu0 0.0
    %294 = vmatpush1.msra.mxu0 0.0
    %295 = vmatprep.subr.mxu0 0.0
    %296 = vmatpush1.msra.mxu0 0.0
    %297 = vmatprep.subr.mxu0 0.0
    %298 = vmatpush1.msra.mxu0 0.0
    %299 = vmatprep.subr.mxu0 0.0
    %300 = vmatpush1.msra.mxu0 0.0
    %301 = vmatprep.subr.mxu0 0.0
    %302 = vmatpush1.msra.mxu0 0.0
    %303 = vmatprep.subr.mxu0 0.0
    %304 = vmatpush1.msra.mxu0 0.0
    %305 = vmatprep.subr.mxu0 0.0
    %306 = vmatpush1.msra.mxu0 0.0
    %307 = vmatprep.mubr.f32.mxu0 0.0
    %v308 = vand.u32 %v31, 4294901760
    %v309 = vsub.f32 %v31, %v308
    %310 = vmatmul.mubr.f32.gmra.mrb[0].mxu0 %v309
    %v311 = vpop.f32.mrb[0].mxu0
    %v312 = vadd.f32 %v224, %v311
    %v313 = vpop.f32.mrb[0].mxu0
    %314 = vdwg.mxu0
    %315 = vmatprep.subr.mxu0 0.0
    %v316 = vand.u32 %v12, 4294901760
    %317 = vmatpush1.msra.mxu0 %v316
    %318 = vmatprep.subr.mxu0 0.0
    %v319 = vand.u32 %v13, 4294901760
    %320 = vmatpush1.msra.mxu0 %v319
    %321 = vmatprep.subr.mxu0 0.0
    %v322 = vand.u32 %v14, 4294901760
    %323 = vmatpush1.msra.mxu0 %v322
    %324 = vmatprep.subr.mxu0 0.0
    %v325 = vand.u32 %v15, 4294901760
    %326 = vmatpush1.msra.mxu0 %v325
    %327 = vmatprep.subr.mxu0 0.0
    %v328 = vand.u32 %v16, 4294901760
    %329 = vmatpush1.msra.mxu0 %v328
    %330 = vmatprep.subr.mxu0 0.0
    %v331 = vand.u32 %v17, 4294901760
    %332 = vmatpush1.msra.mxu0 %v331
    %333 = vmatprep.subr.mxu0 0.0
    %v334 = vand.u32 %v18, 4294901760
    %335 = vmatpush1.msra.mxu0 %v334
    %336 = vmatprep.subr.mxu0 0.0
    %v337 = vand.u32 %v19, 4294901760
    %338 = vmatpush1.msra.mxu0 %v337
    %339 = vmatprep.subr.mxu0 0.0
    %340 = vmatpush1.msra.mxu0 0.0
    %341 = vmatprep.subr.mxu0 0.0
    %342 = vmatpush1.msra.mxu0 0.0
    %343 = vmatprep.subr.mxu0 0.0
    %344 = vmatpush1.msra.mxu0 0.0
    %345 = vmatprep.subr.mxu0 0.0
    %346 = vmatpush1.msra.mxu0 0.0
    %347 = vmatprep.subr.mxu0 0.0
    %348 = vmatpush1.msra.mxu0 0.0
    %349 = vmatprep.subr.mxu0 0.0
    %350 = vmatpush1.msra.mxu0 0.0
    %351 = vmatprep.subr.mxu0 0.0
    %352 = vmatpush1.msra.mxu0 0.0
    %353 = vmatprep.subr.mxu0 0.0
    %354 = vmatpush1.msra.mxu0 0.0
    %355 = vmatprep.subr.mxu0 0.0
    %356 = vmatpush1.msra.mxu0 0.0
    %357 = vmatprep.subr.mxu0 0.0
    %358 = vmatpush1.msra.mxu0 0.0
    %359 = vmatprep.subr.mxu0 0.0
    %360 = vmatpush1.msra.mxu0 0.0
    %361 = vmatprep.subr.mxu0 0.0
    %362 = vmatpush1.msra.mxu0 0.0
    %363 = vmatprep.subr.mxu0 0.0
    %364 = vmatpush1.msra.mxu0 0.0
    %365 = vmatprep.subr.mxu0 0.0
    %366 = vmatpush1.msra.mxu0 0.0
    %367 = vmatprep.subr.mxu0 0.0
    %368 = vmatpush1.msra.mxu0 0.0
    %369 = vmatprep.subr.mxu0 0.0
    %370 = vmatpush1.msra.mxu0 0.0
    %371 = vmatprep.subr.mxu0 0.0
    %372 = vmatpush1.msra.mxu0 0.0
    %373 = vmatprep.subr.mxu0 0.0
    %374 = vmatpush1.msra.mxu0 0.0
    %375 = vmatprep.subr.mxu0 0.0
    %376 = vmatpush1.msra.mxu0 0.0
    %377 = vmatprep.subr.mxu0 0.0
    %378 = vmatpush1.msra.mxu0 0.0
    %379 = vmatprep.subr.mxu0 0.0
    %380 = vmatpush1.msra.mxu0 0.0
    %381 = vmatprep.subr.mxu0 0.0
    %382 = vmatpush1.msra.mxu0 0.0
    %383 = vmatprep.subr.mxu0 0.0
    %384 = vmatpush1.msra.mxu0 0.0
    %385 = vmatprep.subr.mxu0 0.0
    %386 = vmatpush1.msra.mxu0 0.0
    %387 = vmatprep.mubr.f32.mxu0 0.0
    %v388 = vand.u32 %v31, 4294901760
    %v389 = vsub.f32 %v31, %v388
    %v390 = vand.u32 %v389, 4294901760
    %391 = vmatmul.mubr.f32.gmra.mrb[0].mxu0 %v390
    %v392 = vpop.f32.mrb[0].mxu0
    %v393 = vadd.f32 %v312, %v392
    %v394 = vpop.f32.mrb[0].mxu0
    %395 = vdwg.mxu0
    %396 = vmatprep.subr.mxu0 0.0
    %v397 = vand.u32 %v12, 4294901760
    %v398 = vsub.f32 %v12, %v397
    %v399 = vand.u32 %v398, 4294901760
    %400 = vmatpush1.msra.mxu0 %v399
    %401 = vmatprep.subr.mxu0 0.0
    %v402 = vand.u32 %v13, 4294901760
    %v403 = vsub.f32 %v13, %v402
    %v404 = vand.u32 %v403, 4294901760
    %405 = vmatpush1.msra.mxu0 %v404
    %406 = vmatprep.subr.mxu0 0.0
    %v407 = vand.u32 %v14, 4294901760
    %v408 = vsub.f32 %v14, %v407
    %v409 = vand.u32 %v408, 4294901760
    %410 = vmatpush1.msra.mxu0 %v409
    %411 = vmatprep.subr.mxu0 0.0
    %v412 = vand.u32 %v15, 4294901760
    %v413 = vsub.f32 %v15, %v412
    %v414 = vand.u32 %v413, 4294901760
    %415 = vmatpush1.msra.mxu0 %v414
    %416 = vmatprep.subr.mxu0 0.0
    %v417 = vand.u32 %v16, 4294901760
    %v418 = vsub.f32 %v16, %v417
    %v419 = vand.u32 %v418, 4294901760
    %420 = vmatpush1.msra.mxu0 %v419
    %421 = vmatprep.subr.mxu0 0.0
    %v422 = vand.u32 %v17, 4294901760
    %v423 = vsub.f32 %v17, %v422
    %v424 = vand.u32 %v423, 4294901760
    %425 = vmatpush1.msra.mxu0 %v424
    %426 = vmatprep.subr.mxu0 0.0
    %v427 = vand.u32 %v18, 4294901760
    %v428 = vsub.f32 %v18, %v427
    %v429 = vand.u32 %v428, 4294901760
    %430 = vmatpush1.msra.mxu0 %v429
    %431 = vmatprep.subr.mxu0 0.0
    %v432 = vand.u32 %v19, 4294901760
    %v433 = vsub.f32 %v19, %v432
    %v434 = vand.u32 %v433, 4294901760
    %435 = vmatpush1.msra.mxu0 %v434
    %436 = vmatprep.subr.mxu0 0.0
    %437 = vmatpush1.msra.mxu0 0.0
    %438 = vmatprep.subr.mxu0 0.0
    %439 = vmatpush1.msra.mxu0 0.0
    %440 = vmatprep.subr.mxu0 0.0
    %441 = vmatpush1.msra.mxu0 0.0
    %442 = vmatprep.subr.mxu0 0.0
    %443 = vmatpush1.msra.mxu0 0.0
    %444 = vmatprep.subr.mxu0 0.0
    %445 = vmatpush1.msra.mxu0 0.0
    %446 = vmatprep.subr.mxu0 0.0
    %447 = vmatpush1.msra.mxu0 0.0
    %448 = vmatprep.subr.mxu0 0.0
    %449 = vmatpush1.msra.mxu0 0.0
    %450 = vmatprep.subr.mxu0 0.0
    %451 = vmatpush1.msra.mxu0 0.0
    %452 = vmatprep.subr.mxu0 0.0
    %453 = vmatpush1.msra.mxu0 0.0
    %454 = vmatprep.subr.mxu0 0.0
    %455 = vmatpush1.msra.mxu0 0.0
    %456 = vmatprep.subr.mxu0 0.0
    %457 = vmatpush1.msra.mxu0 0.0
    %458 = vmatprep.subr.mxu0 0.0
    %459 = vmatpush1.msra.mxu0 0.0
    %460 = vmatprep.subr.mxu0 0.0
    %461 = vmatpush1.msra.mxu0 0.0
    %462 = vmatprep.subr.mxu0 0.0
    %463 = vmatpush1.msra.mxu0 0.0
    %464 = vmatprep.subr.mxu0 0.0
    %465 = vmatpush1.msra.mxu0 0.0
    %466 = vmatprep.subr.mxu0 0.0
    %467 = vmatpush1.msra.mxu0 0.0
    %468 = vmatprep.subr.mxu0 0.0
    %469 = vmatpush1.msra.mxu0 0.0
    %470 = vmatprep.subr.mxu0 0.0
    %471 = vmatpush1.msra.mxu0 0.0
    %472 = vmatprep.subr.mxu0 0.0
    %473 = vmatpush1.msra.mxu0 0.0
    %474 = vmatprep.subr.mxu0 0.0
    %475 = vmatpush1.msra.mxu0 0.0
    %476 = vmatprep.subr.mxu0 0.0
    %477 = vmatpush1.msra.mxu0 0.0
    %478 = vmatprep.subr.mxu0 0.0
    %479 = vmatpush1.msra.mxu0 0.0
    %480 = vmatprep.subr.mxu0 0.0
    %481 = vmatpush1.msra.mxu0 0.0
    %482 = vmatprep.subr.mxu0 0.0
    %483 = vmatpush1.msra.mxu0 0.0
    %484 = vmatprep.mubr.f32.mxu0 0.0
    %v485 = vand.u32 %v31, 4294901760
    %486 = vmatmul.mubr.f32.gmra.mrb[0].mxu0 %v485
    %v487 = vpop.f32.mrb[0].mxu0
    %v488 = vadd.f32 %v393, %v487
    %v489 = vpop.f32.mrb[0].mxu0
    %490 = vdwg.mxu0
    %491 = vmatprep.subr.mxu0 0.0
    %v492 = vand.u32 %v12, 4294901760
    %493 = vmatpush1.msra.mxu0 %v492
    %494 = vmatprep.subr.mxu0 0.0
    %v495 = vand.u32 %v13, 4294901760
    %496 = vmatpush1.msra.mxu0 %v495
    %497 = vmatprep.subr.mxu0 0.0
    %v498 = vand.u32 %v14, 4294901760
    %499 = vmatpush1.msra.mxu0 %v498
    %500 = vmatprep.subr.mxu0 0.0
    %v501 = vand.u32 %v15, 4294901760
    %502 = vmatpush1.msra.mxu0 %v501
    %503 = vmatprep.subr.mxu0 0.0
    %v504 = vand.u32 %v16, 4294901760
    %505 = vmatpush1.msra.mxu0 %v504
    %506 = vmatprep.subr.mxu0 0.0
    %v507 = vand.u32 %v17, 4294901760
    %508 = vmatpush1.msra.mxu0 %v507
    %509 = vmatprep.subr.mxu0 0.0
    %v510 = vand.u32 %v18, 4294901760
    %511 = vmatpush1.msra.mxu0 %v510
    %512 = vmatprep.subr.mxu0 0.0
    %v513 = vand.u32 %v19, 4294901760
    %514 = vmatpush1.msra.mxu0 %v513
    %515 = vmatprep.subr.mxu0 0.0
    %516 = vmatpush1.msra.mxu0 0.0
    %517 = vmatprep.subr.mxu0 0.0
    %518 = vmatpush1.msra.mxu0 0.0
    %519 = vmatprep.subr.mxu0 0.0
    %520 = vmatpush1.msra.mxu0 0.0
    %521 = vmatprep.subr.mxu0 0.0
    %522 = vmatpush1.msra.mxu0 0.0
    %523 = vmatprep.subr.mxu0 0.0
    %524 = vmatpush1.msra.mxu0 0.0
    %525 = vmatprep.subr.mxu0 0.0
    %526 = vmatpush1.msra.mxu0 0.0
    %527 = vmatprep.subr.mxu0 0.0
    %528 = vmatpush1.msra.mxu0 0.0
    %529 = vmatprep.subr.mxu0 0.0
    %530 = vmatpush1.msra.mxu0 0.0
    %531 = vmatprep.subr.mxu0 0.0
    %532 = vmatpush1.msra.mxu0 0.0
    %533 = vmatprep.subr.mxu0 0.0
    %534 = vmatpush1.msra.mxu0 0.0
    %535 = vmatprep.subr.mxu0 0.0
    %536 = vmatpush1.msra.mxu0 0.0
    %537 = vmatprep.subr.mxu0 0.0
    %538 = vmatpush1.msra.mxu0 0.0
    %539 = vmatprep.subr.mxu0 0.0
    %540 = vmatpush1.msra.mxu0 0.0
    %541 = vmatprep.subr.mxu0 0.0
    %542 = vmatpush1.msra.mxu0 0.0
    %543 = vmatprep.subr.mxu0 0.0
    %544 = vmatpush1.msra.mxu0 0.0
    %545 = vmatprep.subr.mxu0 0.0
    %546 = vmatpush1.msra.mxu0 0.0
    %547 = vmatprep.subr.mxu0 0.0
    %548 = vmatpush1.msra.mxu0 0.0
    %549 = vmatprep.subr.mxu0 0.0
    %550 = vmatpush1.msra.mxu0 0.0
    %551 = vmatprep.subr.mxu0 0.0
    %552 = vmatpush1.msra.mxu0 0.0
    %553 = vmatprep.subr.mxu0 0.0
    %554 = vmatpush1.msra.mxu0 0.0
    %555 = vmatprep.subr.mxu0 0.0
    %556 = vmatpush1.msra.mxu0 0.0
    %557 = vmatprep.subr.mxu0 0.0
    %558 = vmatpush1.msra.mxu0 0.0
    %559 = vmatprep.subr.mxu0 0.0
    %560 = vmatpush1.msra.mxu0 0.0
    %561 = vmatprep.subr.mxu0 0.0
    %562 = vmatpush1.msra.mxu0 0.0
    %563 = vmatprep.mubr.f32.mxu0 0.0
    %v564 = vand.u32 %v31, 4294901760
    %565 = vmatmul.mubr.f32.gmra.mrb[0].mxu0 %v564
    %v566 = vpop.f32.mrb[0].mxu0
    %v567 = vadd.f32 %v488, %v566
    %v568 = vpop.f32.mrb[0].mxu0
    %569 = vdwg.mxu0
    %570 = vset.pattern.permute.xlu0 1
    %571 = vperm.xlu0 %570, %v22
    %v572 = vpop.permute.xlu0 %571
    %vm573 = vcmp.eq.s32.totalorder %v21, %v572
    %v574 = vsel %vm573, 1, 0
    %v575 = vcvt.s32.f32 %v574
    %v577 = vsel %vm29, %v575, 0
    %579 = vmatprep.subr.mxu0 0.0
    %v580 = vand.u32 %v12, 4294901760
    %581 = vmatpush1.msra.mxu0 %v580
    %582 = vmatprep.subr.mxu0 0.0
    %v583 = vand.u32 %v13, 4294901760
    %584 = vmatpush1.msra.mxu0 %v583
    %585 = vmatprep.subr.mxu0 0.0
    %v586 = vand.u32 %v14, 4294901760
    %587 = vmatpush1.msra.mxu0 %v586
    %588 = vmatprep.subr.mxu0 0.0
    %v589 = vand.u32 %v15, 4294901760
    %590 = vmatpush1.msra.mxu0 %v589
    %591 = vmatprep.subr.mxu0 0.0
    %v592 = vand.u32 %v16, 4294901760
    %593 = vmatpush1.msra.mxu0 %v592
    %594 = vmatprep.subr.mxu0 0.0
    %v595 = vand.u32 %v17, 4294901760
    %596 = vmatpush1.msra.mxu0 %v595
    %597 = vmatprep.subr.mxu0 0.0
    %v598 = vand.u32 %v18, 4294901760
    %599 = vmatpush1.msra.mxu0 %v598
    %600 = vmatprep.subr.mxu0 0.0
    %v601 = vand.u32 %v19, 4294901760
    %602 = vmatpush1.msra.mxu0 %v601
    %603 = vmatprep.subr.mxu0 0.0
    %604 = vmatpush1.msra.mxu0 0.0
    %605 = vmatprep.subr.mxu0 0.0
    %606 = vmatpush1.msra.mxu0 0.0
    %607 = vmatprep.subr.mxu0 0.0
    %608 = vmatpush1.msra.mxu0 0.0
    %609 = vmatprep.subr.mxu0 0.0
    %610 = vmatpush1.msra.mxu0 0.0
    %611 = vmatprep.subr.mxu0 0.0
    %612 = vmatpush1.msra.mxu0 0.0
    %613 = vmatprep.subr.mxu0 0.0
    %614 = vmatpush1.msra.mxu0 0.0
    %615 = vmatprep.subr.mxu0 0.0
    %616 = vmatpush1.msra.mxu0 0.0
    %617 = vmatprep.subr.mxu0 0.0
    %618 = vmatpush1.msra.mxu0 0.0
    %619 = vmatprep.subr.mxu0 0.0
    %620 = vmatpush1.msra.mxu0 0.0
    %621 = vmatprep.subr.mxu0 0.0
    %622 = vmatpush1.msra.mxu0 0.0
    %623 = vmatprep.subr.mxu0 0.0
    %624 = vmatpush1.msra.mxu0 0.0
    %625 = vmatprep.subr.mxu0 0.0
    %626 = vmatpush1.msra.mxu0 0.0
    %627 = vmatprep.subr.mxu0 0.0
    %628 = vmatpush1.msra.mxu0 0.0
    %629 = vmatprep.subr.mxu0 0.0
    %630 = vmatpush1.msra.mxu0 0.0
    %631 = vmatprep.subr.mxu0 0.0
    %632 = vmatpush1.msra.mxu0 0.0
    %633 = vmatprep.subr.mxu0 0.0
    %634 = vmatpush1.msra.mxu0 0.0
    %635 = vmatprep.subr.mxu0 0.0
    %636 = vmatpush1.msra.mxu0 0.0
    %637 = vmatprep.subr.mxu0 0.0
    %638 = vmatpush1.msra.mxu0 0.0
    %639 = vmatprep.subr.mxu0 0.0
    %640 = vmatpush1.msra.mxu0 0.0
    %641 = vmatprep.subr.mxu0 0.0
    %642 = vmatpush1.msra.mxu0 0.0
    %643 = vmatprep.subr.mxu0 0.0
    %644 = vmatpush1.msra.mxu0 0.0
    %645 = vmatprep.subr.mxu0 0.0
    %646 = vmatpush1.msra.mxu0 0.0
    %647 = vmatprep.subr.mxu0 0.0
    %648 = vmatpush1.msra.mxu0 0.0
    %649 = vmatprep.subr.mxu0 0.0
    %650 = vmatpush1.msra.mxu0 0.0
    %651 = vmatprep.mubr.f32.mxu0 0.0
    %v652 = vand.u32 %v577, 4294901760
    %v653 = vsub.f32 %v577, %v652
    %v654 = vand.u32 %v653, 4294901760
    %v655 = vsub.f32 %v653, %v654
    %v656 = vand.u32 %v655, 4294901760
    %657 = vmatmul.mubr.f32.gmra.mrb[0].mxu0 %v656
    %v658 = vpop.f32.mrb[0].mxu0
    %v659 = vadd.f32 0.0, %v658
    %v660 = vpop.f32.mrb[0].mxu0
    %661 = vdwg.mxu0
    %662 = vmatprep.subr.mxu0 0.0
    %v663 = vand.u32 %v12, 4294901760
    %v664 = vsub.f32 %v12, %v663
    %v665 = vand.u32 %v664, 4294901760
    %v666 = vsub.f32 %v664, %v665
    %v667 = vand.u32 %v666, 4294901760
    %668 = vmatpush1.msra.mxu0 %v667
    %669 = vmatprep.subr.mxu0 0.0
    %v670 = vand.u32 %v13, 4294901760
    %v671 = vsub.f32 %v13, %v670
    %v672 = vand.u32 %v671, 4294901760
    %v673 = vsub.f32 %v671, %v672
    %v674 = vand.u32 %v673, 4294901760
    %675 = vmatpush1.msra.mxu0 %v674
    %676 = vmatprep.subr.mxu0 0.0
    %v677 = vand.u32 %v14, 4294901760
    %v678 = vsub.f32 %v14, %v677
    %v679 = vand.u32 %v678, 4294901760
    %v680 = vsub.f32 %v678, %v679
    %v681 = vand.u32 %v680, 4294901760
    %682 = vmatpush1.msra.mxu0 %v681
    %683 = vmatprep.subr.mxu0 0.0
    %v684 = vand.u32 %v15, 4294901760
    %v685 = vsub.f32 %v15, %v684
    %v686 = vand.u32 %v685, 4294901760
    %v687 = vsub.f32 %v685, %v686
    %v688 = vand.u32 %v687, 4294901760
    %689 = vmatpush1.msra.mxu0 %v688
    %690 = vmatprep.subr.mxu0 0.0
    %v691 = vand.u32 %v16, 4294901760
    %v692 = vsub.f32 %v16, %v691
    %v693 = vand.u32 %v692, 4294901760
    %v694 = vsub.f32 %v692, %v693
    %v695 = vand.u32 %v694, 4294901760
    %696 = vmatpush1.msra.mxu0 %v695
    %697 = vmatprep.subr.mxu0 0.0
    %v698 = vand.u32 %v17, 4294901760
    %v699 = vsub.f32 %v17, %v698
    %v700 = vand.u32 %v699, 4294901760
    %v701 = vsub.f32 %v699, %v700
    %v702 = vand.u32 %v701, 4294901760
    %703 = vmatpush1.msra.mxu0 %v702
    %704 = vmatprep.subr.mxu0 0.0
    %v705 = vand.u32 %v18, 4294901760
    %v706 = vsub.f32 %v18, %v705
    %v707 = vand.u32 %v706, 4294901760
    %v708 = vsub.f32 %v706, %v707
    %v709 = vand.u32 %v708, 4294901760
    %710 = vmatpush1.msra.mxu0 %v709
    %711 = vmatprep.subr.mxu0 0.0
    %v712 = vand.u32 %v19, 4294901760
    %v713 = vsub.f32 %v19, %v712
    %v714 = vand.u32 %v713, 4294901760
    %v715 = vsub.f32 %v713, %v714
    %v716 = vand.u32 %v715, 4294901760
    %717 = vmatpush1.msra.mxu0 %v716
    %718 = vmatprep.subr.mxu0 0.0
    %719 = vmatpush1.msra.mxu0 0.0
    %720 = vmatprep.subr.mxu0 0.0
    %721 = vmatpush1.msra.mxu0 0.0
    %722 = vmatprep.subr.mxu0 0.0
    %723 = vmatpush1.msra.mxu0 0.0
    %724 = vmatprep.subr.mxu0 0.0
    %725 = vmatpush1.msra.mxu0 0.0
    %726 = vmatprep.subr.mxu0 0.0
    %727 = vmatpush1.msra.mxu0 0.0
    %728 = vmatprep.subr.mxu0 0.0
    %729 = vmatpush1.msra.mxu0 0.0
    %730 = vmatprep.subr.mxu0 0.0
    %731 = vmatpush1.msra.mxu0 0.0
    %732 = vmatprep.subr.mxu0 0.0
    %733 = vmatpush1.msra.mxu0 0.0
    %734 = vmatprep.subr.mxu0 0.0
    %735 = vmatpush1.msra.mxu0 0.0
    %736 = vmatprep.subr.mxu0 0.0
    %737 = vmatpush1.msra.mxu0 0.0
    %738 = vmatprep.subr.mxu0 0.0
    %739 = vmatpush1.msra.mxu0 0.0
    %740 = vmatprep.subr.mxu0 0.0
    %741 = vmatpush1.msra.mxu0 0.0
    %742 = vmatprep.subr.mxu0 0.0
    %743 = vmatpush1.msra.mxu0 0.0
    %744 = vmatprep.subr.mxu0 0.0
    %745 = vmatpush1.msra.mxu0 0.0
    %746 = vmatprep.subr.mxu0 0.0
    %747 = vmatpush1.msra.mxu0 0.0
    %748 = vmatprep.subr.mxu0 0.0
    %749 = vmatpush1.msra.mxu0 0.0
    %750 = vmatprep.subr.mxu0 0.0
    %751 = vmatpush1.msra.mxu0 0.0
    %752 = vmatprep.subr.mxu0 0.0
    %753 = vmatpush1.msra.mxu0 0.0
    %754 = vmatprep.subr.mxu0 0.0
    %755 = vmatpush1.msra.mxu0 0.0
    %756 = vmatprep.subr.mxu0 0.0
    %757 = vmatpush1.msra.mxu0 0.0
    %758 = vmatprep.subr.mxu0 0.0
    %759 = vmatpush1.msra.mxu0 0.0
    %760 = vmatprep.subr.mxu0 0.0
    %761 = vmatpush1.msra.mxu0 0.0
    %762 = vmatprep.subr.mxu0 0.0
    %763 = vmatpush1.msra.mxu0 0.0
    %764 = vmatprep.subr.mxu0 0.0
    %765 = vmatpush1.msra.mxu0 0.0
    %766 = vmatprep.mubr.f32.mxu0 0.0
    %v767 = vand.u32 %v577, 4294901760
    %768 = vmatmul.mubr.f32.gmra.mrb[0].mxu0 %v767
    %v769 = vpop.f32.mrb[0].mxu0
    %v770 = vadd.f32 %v659, %v769
    %v771 = vpop.f32.mrb[0].mxu0
    %772 = vdwg.mxu0
    %773 = vmatprep.subr.mxu0 0.0
    %v774 = vand.u32 %v12, 4294901760
    %v775 = vsub.f32 %v12, %v774
    %776 = vmatpush1.msra.mxu0 %v775
    %777 = vmatprep.subr.mxu0 0.0
    %v778 = vand.u32 %v13, 4294901760
    %v779 = vsub.f32 %v13, %v778
    %780 = vmatpush1.msra.mxu0 %v779
    %781 = vmatprep.subr.mxu0 0.0
    %v782 = vand.u32 %v14, 4294901760
    %v783 = vsub.f32 %v14, %v782
    %784 = vmatpush1.msra.mxu0 %v783
    %785 = vmatprep.subr.mxu0 0.0
    %v786 = vand.u32 %v15, 4294901760
    %v787 = vsub.f32 %v15, %v786
    %788 = vmatpush1.msra.mxu0 %v787
    %789 = vmatprep.subr.mxu0 0.0
    %v790 = vand.u32 %v16, 4294901760
    %v791 = vsub.f32 %v16, %v790
    %792 = vmatpush1.msra.mxu0 %v791
    %793 = vmatprep.subr.mxu0 0.0
    %v794 = vand.u32 %v17, 4294901760
    %v795 = vsub.f32 %v17, %v794
    %796 = vmatpush1.msra.mxu0 %v795
    %797 = vmatprep.subr.mxu0 0.0
    %v798 = vand.u32 %v18, 4294901760
    %v799 = vsub.f32 %v18, %v798
    %800 = vmatpush1.msra.mxu0 %v799
    %801 = vmatprep.subr.mxu0 0.0
    %v802 = vand.u32 %v19, 4294901760
    %v803 = vsub.f32 %v19, %v802
    %804 = vmatpush1.msra.mxu0 %v803
    %805 = vmatprep.subr.mxu0 0.0
    %806 = vmatpush1.msra.mxu0 0.0
    %807 = vmatprep.subr.mxu0 0.0
    %808 = vmatpush1.msra.mxu0 0.0
    %809 = vmatprep.subr.mxu0 0.0
    %810 = vmatpush1.msra.mxu0 0.0
    %811 = vmatprep.subr.mxu0 0.0
    %812 = vmatpush1.msra.mxu0 0.0
    %813 = vmatprep.subr.mxu0 0.0
    %814 = vmatpush1.msra.mxu0 0.0
    %815 = vmatprep.subr.mxu0 0.0
    %816 = vmatpush1.msra.mxu0 0.0
    %817 = vmatprep.subr.mxu0 0.0
    %818 = vmatpush1.msra.mxu0 0.0
    %819 = vmatprep.subr.mxu0 0.0
    %820 = vmatpush1.msra.mxu0 0.0
    %821 = vmatprep.subr.mxu0 0.0
    %822 = vmatpush1.msra.mxu0 0.0
    %823 = vmatprep.subr.mxu0 0.0
    %824 = vmatpush1.msra.mxu0 0.0
    %825 = vmatprep.subr.mxu0 0.0
    %826 = vmatpush1.msra.mxu0 0.0
    %827 = vmatprep.subr.mxu0 0.0
    %828 = vmatpush1.msra.mxu0 0.0
    %829 = vmatprep.subr.mxu0 0.0
    %830 = vmatpush1.msra.mxu0 0.0
    %831 = vmatprep.subr.mxu0 0.0
    %832 = vmatpush1.msra.mxu0 0.0
    %833 = vmatprep.subr.mxu0 0.0
    %834 = vmatpush1.msra.mxu0 0.0
    %835 = vmatprep.subr.mxu0 0.0
    %836 = vmatpush1.msra.mxu0 0.0
    %837 = vmatprep.subr.mxu0 0.0
    %838 = vmatpush1.msra.mxu0 0.0
    %839 = vmatprep.subr.mxu0 0.0
    %840 = vmatpush1.msra.mxu0 0.0
    %841 = vmatprep.subr.mxu0 0.0
    %842 = vmatpush1.msra.mxu0 0.0
    %843 = vmatprep.subr.mxu0 0.0
    %844 = vmatpush1.msra.mxu0 0.0
    %845 = vmatprep.subr.mxu0 0.0
    %846 = vmatpush1.msra.mxu0 0.0
    %847 = vmatprep.subr.mxu0 0.0
    %848 = vmatpush1.msra.mxu0 0.0
    %849 = vmatprep.subr.mxu0 0.0
    %850 = vmatpush1.msra.mxu0 0.0
    %851 = vmatprep.subr.mxu0 0.0
    %852 = vmatpush1.msra.mxu0 0.0
    %853 = vmatprep.mubr.f32.mxu0 0.0
    %v854 = vand.u32 %v577, 4294901760
    %v855 = vsub.f32 %v577, %v854
    %856 = vmatmul.mubr.f32.gmra.mrb[0].mxu0 %v855
    %v857 = vpop.f32.mrb[0].mxu0
    %v858 = vadd.f32 %v770, %v857
    %v859 = vpop.f32.mrb[0].mxu0
    %860 = vdwg.mxu0
    %861 = vmatprep.subr.mxu0 0.0
    %v862 = vand.u32 %v12, 4294901760
    %863 = vmatpush1.msra.mxu0 %v862
    %864 = vmatprep.subr.mxu0 0.0
    %v865 = vand.u32 %v13, 4294901760
    %866 = vmatpush1.msra.mxu0 %v865
    %867 = vmatprep.subr.mxu0 0.0
    %v868 = vand.u32 %v14, 4294901760
    %869 = vmatpush1.msra.mxu0 %v868
    %870 = vmatprep.subr.mxu0 0.0
    %v871 = vand.u32 %v15, 4294901760
    %872 = vmatpush1.msra.mxu0 %v871
    %873 = vmatprep.subr.mxu0 0.0
    %v874 = vand.u32 %v16, 4294901760
    %875 = vmatpush1.msra.mxu0 %v874
    %876 = vmatprep.subr.mxu0 0.0
    %v877 = vand.u32 %v17, 4294901760
    %878 = vmatpush1.msra.mxu0 %v877
    %879 = vmatprep.subr.mxu0 0.0
    %v880 = vand.u32 %v18, 4294901760
    %881 = vmatpush1.msra.mxu0 %v880
    %882 = vmatprep.subr.mxu0 0.0
    %v883 = vand.u32 %v19, 4294901760
    %884 = vmatpush1.msra.mxu0 %v883
    %885 = vmatprep.subr.mxu0 0.0
    %886 = vmatpush1.msra.mxu0 0.0
    %887 = vmatprep.subr.mxu0 0.0
    %888 = vmatpush1.msra.mxu0 0.0
    %889 = vmatprep.subr.mxu0 0.0
    %890 = vmatpush1.msra.mxu0 0.0
    %891 = vmatprep.subr.mxu0 0.0
    %892 = vmatpush1.msra.mxu0 0.0
    %893 = vmatprep.subr.mxu0 0.0
    %894 = vmatpush1.msra.mxu0 0.0
    %895 = vmatprep.subr.mxu0 0.0
    %896 = vmatpush1.msra.mxu0 0.0
    %897 = vmatprep.subr.mxu0 0.0
    %898 = vmatpush1.msra.mxu0 0.0
    %899 = vmatprep.subr.mxu0 0.0
    %900 = vmatpush1.msra.mxu0 0.0
    %901 = vmatprep.subr.mxu0 0.0
    %902 = vmatpush1.msra.mxu0 0.0
    %903 = vmatprep.subr.mxu0 0.0
    %904 = vmatpush1.msra.mxu0 0.0
    %905 = vmatprep.subr.mxu0 0.0
    %906 = vmatpush1.msra.mxu0 0.0
    %907 = vmatprep.subr.mxu0 0.0
    %908 = vmatpush1.msra.mxu0 0.0
    %909 = vmatprep.subr.mxu0 0.0
    %910 = vmatpush1.msra.mxu0 0.0
    %911 = vmatprep.subr.mxu0 0.0
    %912 = vmatpush1.msra.mxu0 0.0
    %913 = vmatprep.subr.mxu0 0.0
    %914 = vmatpush1.msra.mxu0 0.0
    %915 = vmatprep.subr.mxu0 0.0
    %916 = vmatpush1.msra.mxu0 0.0
    %917 = vmatprep.subr.mxu0 0.0
    %918 = vmatpush1.msra.mxu0 0.0
    %919 = vmatprep.subr.mxu0 0.0
    %920 = vmatpush1.msra.mxu0 0.0
    %921 = vmatprep.subr.mxu0 0.0
    %922 = vmatpush1.msra.mxu0 0.0
    %923 = vmatprep.subr.mxu0 0.0
    %924 = vmatpush1.msra.mxu0 0.0
    %925 = vmatprep.subr.mxu0 0.0
    %926 = vmatpush1.msra.mxu0 0.0
    %927 = vmatprep.subr.mxu0 0.0
    %928 = vmatpush1.msra.mxu0 0.0
    %929 = vmatprep.subr.mxu0 0.0
    %930 = vmatpush1.msra.mxu0 0.0
    %931 = vmatprep.subr.mxu0 0.0
    %932 = vmatpush1.msra.mxu0 0.0
    %933 = vmatprep.mubr.f32.mxu0 0.0
    %v934 = vand.u32 %v577, 4294901760
    %v935 = vsub.f32 %v577, %v934
    %v936 = vand.u32 %v935, 4294901760
    %937 = vmatmul.mubr.f32.gmra.mrb[0].mxu0 %v936
    %v938 = vpop.f32.mrb[0].mxu0
    %v939 = vadd.f32 %v858, %v938
    %v940 = vpop.f32.mrb[0].mxu0
    %941 = vdwg.mxu0
    %942 = vmatprep.subr.mxu0 0.0
    %v943 = vand.u32 %v12, 4294901760
    %v944 = vsub.f32 %v12, %v943
    %v945 = vand.u32 %v944, 4294901760
    %946 = vmatpush1.msra.mxu0 %v945
    %947 = vmatprep.subr.mxu0 0.0
    %v948 = vand.u32 %v13, 4294901760
    %v949 = vsub.f32 %v13, %v948
    %v950 = vand.u32 %v949, 4294901760
    %951 = vmatpush1.msra.mxu0 %v950
    %952 = vmatprep.subr.mxu0 0.0
    %v953 = vand.u32 %v14, 4294901760
    %v954 = vsub.f32 %v14, %v953
    %v955 = vand.u32 %v954, 4294901760
    %956 = vmatpush1.msra.mxu0 %v955
    %957 = vmatprep.subr.mxu0 0.0
    %v958 = vand.u32 %v15, 4294901760
    %v959 = vsub.f32 %v15, %v958
    %v960 = vand.u32 %v959, 4294901760
    %961 = vmatpush1.msra.mxu0 %v960
    %962 = vmatprep.subr.mxu0 0.0
    %v963 = vand.u32 %v16, 4294901760
    %v964 = vsub.f32 %v16, %v963
    %v965 = vand.u32 %v964, 4294901760
    %966 = vmatpush1.msra.mxu0 %v965
    %967 = vmatprep.subr.mxu0 0.0
    %v968 = vand.u32 %v17, 4294901760
    %v969 = vsub.f32 %v17, %v968
    %v970 = vand.u32 %v969, 4294901760
    %971 = vmatpush1.msra.mxu0 %v970
    %972 = vmatprep.subr.mxu0 0.0
    %v973 = vand.u32 %v18, 4294901760
    %v974 = vsub.f32 %v18, %v973
    %v975 = vand.u32 %v974, 4294901760
    %976 = vmatpush1.msra.mxu0 %v975
    %977 = vmatprep.subr.mxu0 0.0
    %v978 = vand.u32 %v19, 4294901760
    %v979 = vsub.f32 %v19, %v978
    %v980 = vand.u32 %v979, 4294901760
    %981 = vmatpush1.msra.mxu0 %v980
    %982 = vmatprep.subr.mxu0 0.0
    %983 = vmatpush1.msra.mxu0 0.0
    %984 = vmatprep.subr.mxu0 0.0
    %985 = vmatpush1.msra.mxu0 0.0
    %986 = vmatprep.subr.mxu0 0.0
    %987 = vmatpush1.msra.mxu0 0.0
    %988 = vmatprep.subr.mxu0 0.0
    %989 = vmatpush1.msra.mxu0 0.0
    %990 = vmatprep.subr.mxu0 0.0
    %991 = vmatpush1.msra.mxu0 0.0
    %992 = vmatprep.subr.mxu0 0.0
    %993 = vmatpush1.msra.mxu0 0.0
    %994 = vmatprep.subr.mxu0 0.0
    %995 = vmatpush1.msra.mxu0 0.0
    %996 = vmatprep.subr.mxu0 0.0
    %997 = vmatpush1.msra.mxu0 0.0
    %998 = vmatprep.subr.mxu0 0.0
    %999 = vmatpush1.msra.mxu0 0.0
    %1000 = vmatprep.subr.mxu0 0.0
    %1001 = vmatpush1.msra.mxu0 0.0
    %1002 = vmatprep.subr.mxu0 0.0
    %1003 = vmatpush1.msra.mxu0 0.0
    %1004 = vmatprep.subr.mxu0 0.0
    %1005 = vmatpush1.msra.mxu0 0.0
    %1006 = vmatprep.subr.mxu0 0.0
    %1007 = vmatpush1.msra.mxu0 0.0
    %1008 = vmatprep.subr.mxu0 0.0
    %1009 = vmatpush1.msra.mxu0 0.0
    %1010 = vmatprep.subr.mxu0 0.0
    %1011 = vmatpush1.msra.mxu0 0.0
    %1012 = vmatprep.subr.mxu0 0.0
    %1013 = vmatpush1.msra.mxu0 0.0
    %1014 = vmatprep.subr.mxu0 0.0
    %1015 = vmatpush1.msra.mxu0 0.0
    %1016 = vmatprep.subr.mxu0 0.0
    %1017 = vmatpush1.msra.mxu0 0.0
    %1018 = vmatprep.subr.mxu0 0.0
    %1019 = vmatpush1.msra.mxu0 0.0
    %1020 = vmatprep.subr.mxu0 0.0
    %1021 = vmatpush1.msra.mxu0 0.0
    %1022 = vmatprep.subr.mxu0 0.0
    %1023 = vmatpush1.msra.mxu0 0.0
    %1024 = vmatprep.subr.mxu0 0.0
    %1025 = vmatpush1.msra.mxu0 0.0
    %1026 = vmatprep.subr.mxu0 0.0
    %1027 = vmatpush1.msra.mxu0 0.0
    %1028 = vmatprep.subr.mxu0 0.0
    %1029 = vmatpush1.msra.mxu0 0.0
    %1030 = vmatprep.mubr.f32.mxu0 0.0
    %v1031 = vand.u32 %v577, 4294901760
    %1032 = vmatmul.mubr.f32.gmra.mrb[0].mxu0 %v1031
    %v1033 = vpop.f32.mrb[0].mxu0
    %v1034 = vadd.f32 %v939, %v1033
    %v1035 = vpop.f32.mrb[0].mxu0
    %1036 = vdwg.mxu0
    %1037 = vmatprep.subr.mxu0 0.0
    %v1038 = vand.u32 %v12, 4294901760
    %1039 = vmatpush1.msra.mxu0 %v1038
    %1040 = vmatprep.subr.mxu0 0.0
    %v1041 = vand.u32 %v13, 4294901760
    %1042 = vmatpush1.msra.mxu0 %v1041
    %1043 = vmatprep.subr.mxu0 0.0
    %v1044 = vand.u32 %v14, 4294901760
    %1045 = vmatpush1.msra.mxu0 %v1044
    %1046 = vmatprep.subr.mxu0 0.0
    %v1047 = vand.u32 %v15, 4294901760
    %1048 = vmatpush1.msra.mxu0 %v1047
    %1049 = vmatprep.subr.mxu0 0.0
    %v1050 = vand.u32 %v16, 4294901760
    %1051 = vmatpush1.msra.mxu0 %v1050
    %1052 = vmatprep.subr.mxu0 0.0
    %v1053 = vand.u32 %v17, 4294901760
    %1054 = vmatpush1.msra.mxu0 %v1053
    %1055 = vmatprep.subr.mxu0 0.0
    %v1056 = vand.u32 %v18, 4294901760
    %1057 = vmatpush1.msra.mxu0 %v1056
    %1058 = vmatprep.subr.mxu0 0.0
    %v1059 = vand.u32 %v19, 4294901760
    %1060 = vmatpush1.msra.mxu0 %v1059
    %1061 = vmatprep.subr.mxu0 0.0
    %1062 = vmatpush1.msra.mxu0 0.0
    %1063 = vmatprep.subr.mxu0 0.0
    %1064 = vmatpush1.msra.mxu0 0.0
    %1065 = vmatprep.subr.mxu0 0.0
    %1066 = vmatpush1.msra.mxu0 0.0
    %1067 = vmatprep.subr.mxu0 0.0
    %1068 = vmatpush1.msra.mxu0 0.0
    %1069 = vmatprep.subr.mxu0 0.0
    %1070 = vmatpush1.msra.mxu0 0.0
    %1071 = vmatprep.subr.mxu0 0.0
    %1072 = vmatpush1.msra.mxu0 0.0
    %1073 = vmatprep.subr.mxu0 0.0
    %1074 = vmatpush1.msra.mxu0 0.0
    %1075 = vmatprep.subr.mxu0 0.0
    %1076 = vmatpush1.msra.mxu0 0.0
    %1077 = vmatprep.subr.mxu0 0.0
    %1078 = vmatpush1.msra.mxu0 0.0
    %1079 = vmatprep.subr.mxu0 0.0
    %1080 = vmatpush1.msra.mxu0 0.0
    %1081 = vmatprep.subr.mxu0 0.0
    %1082 = vmatpush1.msra.mxu0 0.0
    %1083 = vmatprep.subr.mxu0 0.0
    %1084 = vmatpush1.msra.mxu0 0.0
    %1085 = vmatprep.subr.mxu0 0.0
    %1086 = vmatpush1.msra.mxu0 0.0
    %1087 = vmatprep.subr.mxu0 0.0
    %1088 = vmatpush1.msra.mxu0 0.0
    %1089 = vmatprep.subr.mxu0 0.0
    %1090 = vmatpush1.msra.mxu0 0.0
    %1091 = vmatprep.subr.mxu0 0.0
    %1092 = vmatpush1.msra.mxu0 0.0
    %1093 = vmatprep.subr.mxu0 0.0
    %1094 = vmatpush1.msra.mxu0 0.0
    %1095 = vmatprep.subr.mxu0 0.0
    %1096 = vmatpush1.msra.mxu0 0.0
    %1097 = vmatprep.subr.mxu0 0.0
    %1098 = vmatpush1.msra.mxu0 0.0
    %1099 = vmatprep.subr.mxu0 0.0
    %1100 = vmatpush1.msra.mxu0 0.0
    %1101 = vmatprep.subr.mxu0 0.0
    %1102 = vmatpush1.msra.mxu0 0.0
    %1103 = vmatprep.subr.mxu0 0.0
    %1104 = vmatpush1.msra.mxu0 0.0
    %1105 = vmatprep.subr.mxu0 0.0
    %1106 = vmatpush1.msra.mxu0 0.0
    %1107 = vmatprep.subr.mxu0 0.0
    %1108 = vmatpush1.msra.mxu0 0.0
    %1109 = vmatprep.mubr.f32.mxu0 0.0
    %v1110 = vand.u32 %v577, 4294901760
    %1111 = vmatmul.mubr.f32.gmra.mrb[0].mxu0 %v1110
    %v1112 = vpop.f32.mrb[0].mxu0
    %v1113 = vadd.f32 %v1034, %v1112
    %v1114 = vpop.f32.mrb[0].mxu0
    %1115 = vdwg.mxu0
    %1116 = vset.pattern.permute.xlu0 2
    %1117 = vperm.xlu0 %1116, %v22
    %v1118 = vpop.permute.xlu0 %1117
    %vm1119 = vcmp.eq.s32.totalorder %v21, %v1118
    %v1120 = vsel %vm1119, 1, 0
    %v1121 = vcvt.s32.f32 %v1120
    %v1123 = vsel %vm29, %v1121, 0
    %1125 = vmatprep.subr.mxu0 0.0
    %v1126 = vand.u32 %v12, 4294901760
    %1127 = vmatpush1.msra.mxu0 %v1126
    %1128 = vmatprep.subr.mxu0 0.0
    %v1129 = vand.u32 %v13, 4294901760
    %1130 = vmatpush1.msra.mxu0 %v1129
    %1131 = vmatprep.subr.mxu0 0.0
    %v1132 = vand.u32 %v14, 4294901760
    %1133 = vmatpush1.msra.mxu0 %v1132
    %1134 = vmatprep.subr.mxu0 0.0
    %v1135 = vand.u32 %v15, 4294901760
    %1136 = vmatpush1.msra.mxu0 %v1135
    %1137 = vmatprep.subr.mxu0 0.0
    %v1138 = vand.u32 %v16, 4294901760
    %1139 = vmatpush1.msra.mxu0 %v1138
    %1140 = vmatprep.subr.mxu0 0.0
    %v1141 = vand.u32 %v17, 4294901760
    %1142 = vmatpush1.msra.mxu0 %v1141
    %1143 = vmatprep.subr.mxu0 0.0
    %v1144 = vand.u32 %v18, 4294901760
    %1145 = vmatpush1.msra.mxu0 %v1144
    %1146 = vmatprep.subr.mxu0 0.0
    %v1147 = vand.u32 %v19, 4294901760
    %1148 = vmatpush1.msra.mxu0 %v1147
    %1149 = vmatprep.subr.mxu0 0.0
    %1150 = vmatpush1.msra.mxu0 0.0
    %1151 = vmatprep.subr.mxu0 0.0
    %1152 = vmatpush1.msra.mxu0 0.0
    %1153 = vmatprep.subr.mxu0 0.0
    %1154 = vmatpush1.msra.mxu0 0.0
    %1155 = vmatprep.subr.mxu0 0.0
    %1156 = vmatpush1.msra.mxu0 0.0
    %1157 = vmatprep.subr.mxu0 0.0
    %1158 = vmatpush1.msra.mxu0 0.0
    %1159 = vmatprep.subr.mxu0 0.0
    %1160 = vmatpush1.msra.mxu0 0.0
    %1161 = vmatprep.subr.mxu0 0.0
    %1162 = vmatpush1.msra.mxu0 0.0
    %1163 = vmatprep.subr.mxu0 0.0
    %1164 = vmatpush1.msra.mxu0 0.0
    %1165 = vmatprep.subr.mxu0 0.0
    %1166 = vmatpush1.msra.mxu0 0.0
    %1167 = vmatprep.subr.mxu0 0.0
    %1168 = vmatpush1.msra.mxu0 0.0
    %1169 = vmatprep.subr.mxu0 0.0
    %1170 = vmatpush1.msra.mxu0 0.0
    %1171 = vmatprep.subr.mxu0 0.0
    %1172 = vmatpush1.msra.mxu0 0.0
    %1173 = vmatprep.subr.mxu0 0.0
    %1174 = vmatpush1.msra.mxu0 0.0
    %1175 = vmatprep.subr.mxu0 0.0
    %1176 = vmatpush1.msra.mxu0 0.0
    %1177 = vmatprep.subr.mxu0 0.0
    %1178 = vmatpush1.msra.mxu0 0.0
    %1179 = vmatprep.subr.mxu0 0.0
    %1180 = vmatpush1.msra.mxu0 0.0
    %1181 = vmatprep.subr.mxu0 0.0
    %1182 = vmatpush1.msra.mxu0 0.0
    %1183 = vmatprep.subr.mxu0 0.0
    %1184 = vmatpush1.msra.mxu0 0.0
    %1185 = vmatprep.subr.mxu0 0.0
    %1186 = vmatpush1.msra.mxu0 0.0
    %1187 = vmatprep.subr.mxu0 0.0
    %1188 = vmatpush1.msra.mxu0 0.0
    %1189 = vmatprep.subr.mxu0 0.0
    %1190 = vmatpush1.msra.mxu0 0.0
    %1191 = vmatprep.subr.mxu0 0.0
    %1192 = vmatpush1.msra.mxu0 0.0
    %1193 = vmatprep.subr.mxu0 0.0
    %1194 = vmatpush1.msra.mxu0 0.0
    %1195 = vmatprep.subr.mxu0 0.0
    %1196 = vmatpush1.msra.mxu0 0.0
    %1197 = vmatprep.mubr.f32.mxu0 0.0
    %v1198 = vand.u32 %v1123, 4294901760
    %v1199 = vsub.f32 %v1123, %v1198
    %v1200 = vand.u32 %v1199, 4294901760
    %v1201 = vsub.f32 %v1199, %v1200
    %v1202 = vand.u32 %v1201, 4294901760
    %1203 = vmatmul.mubr.f32.gmra.mrb[0].mxu0 %v1202
    %v1204 = vpop.f32.mrb[0].mxu0
    %v1205 = vadd.f32 0.0, %v1204
    %v1206 = vpop.f32.mrb[0].mxu0
    %1207 = vdwg.mxu0
    %1208 = vmatprep.subr.mxu0 0.0
    %v1209 = vand.u32 %v12, 4294901760
    %v1210 = vsub.f32 %v12, %v1209
    %v1211 = vand.u32 %v1210, 4294901760
    %v1212 = vsub.f32 %v1210, %v1211
    %v1213 = vand.u32 %v1212, 4294901760
    %1214 = vmatpush1.msra.mxu0 %v1213
    %1215 = vmatprep.subr.mxu0 0.0
    %v1216 = vand.u32 %v13, 4294901760
    %v1217 = vsub.f32 %v13, %v1216
    %v1218 = vand.u32 %v1217, 4294901760
    %v1219 = vsub.f32 %v1217, %v1218
    %v1220 = vand.u32 %v1219, 4294901760
    %1221 = vmatpush1.msra.mxu0 %v1220
    %1222 = vmatprep.subr.mxu0 0.0
    %v1223 = vand.u32 %v14, 4294901760
    %v1224 = vsub.f32 %v14, %v1223
    %v1225 = vand.u32 %v1224, 4294901760
    %v1226 = vsub.f32 %v1224, %v1225
    %v1227 = vand.u32 %v1226, 4294901760
    %1228 = vmatpush1.msra.mxu0 %v1227
    %1229 = vmatprep.subr.mxu0 0.0
    %v1230 = vand.u32 %v15, 4294901760
    %v1231 = vsub.f32 %v15, %v1230
    %v1232 = vand.u32 %v1231, 4294901760
    %v1233 = vsub.f32 %v1231, %v1232
    %v1234 = vand.u32 %v1233, 4294901760
    %1235 = vmatpush1.msra.mxu0 %v1234
    %1236 = vmatprep.subr.mxu0 0.0
    %v1237 = vand.u32 %v16, 4294901760
    %v1238 = vsub.f32 %v16, %v1237
    %v1239 = vand.u32 %v1238, 4294901760
    %v1240 = vsub.f32 %v1238, %v1239
    %v1241 = vand.u32 %v1240, 4294901760
    %1242 = vmatpush1.msra.mxu0 %v1241
    %1243 = vmatprep.subr.mxu0 0.0
    %v1244 = vand.u32 %v17, 4294901760
    %v1245 = vsub.f32 %v17, %v1244
    %v1246 = vand.u32 %v1245, 4294901760
    %v1247 = vsub.f32 %v1245, %v1246
    %v1248 = vand.u32 %v1247, 4294901760
    %1249 = vmatpush1.msra.mxu0 %v1248
    %1250 = vmatprep.subr.mxu0 0.0
    %v1251 = vand.u32 %v18, 4294901760
    %v1252 = vsub.f32 %v18, %v1251
    %v1253 = vand.u32 %v1252, 4294901760
    %v1254 = vsub.f32 %v1252, %v1253
    %v1255 = vand.u32 %v1254, 4294901760
    %1256 = vmatpush1.msra.mxu0 %v1255
    %1257 = vmatprep.subr.mxu0 0.0
    %v1258 = vand.u32 %v19, 4294901760
    %v1259 = vsub.f32 %v19, %v1258
    %v1260 = vand.u32 %v1259, 4294901760
    %v1261 = vsub.f32 %v1259, %v1260
    %v1262 = vand.u32 %v1261, 4294901760
    %1263 = vmatpush1.msra.mxu0 %v1262
    %1264 = vmatprep.subr.mxu0 0.0
    %1265 = vmatpush1.msra.mxu0 0.0
    %1266 = vmatprep.subr.mxu0 0.0
    %1267 = vmatpush1.msra.mxu0 0.0
    %1268 = vmatprep.subr.mxu0 0.0
    %1269 = vmatpush1.msra.mxu0 0.0
    %1270 = vmatprep.subr.mxu0 0.0
    %1271 = vmatpush1.msra.mxu0 0.0
    %1272 = vmatprep.subr.mxu0 0.0
    %1273 = vmatpush1.msra.mxu0 0.0
    %1274 = vmatprep.subr.mxu0 0.0
    %1275 = vmatpush1.msra.mxu0 0.0
    %1276 = vmatprep.subr.mxu0 0.0
    %1277 = vmatpush1.msra.mxu0 0.0
    %1278 = vmatprep.subr.mxu0 0.0
    %1279 = vmatpush1.msra.mxu0 0.0
    %1280 = vmatprep.subr.mxu0 0.0
    %1281 = vmatpush1.msra.mxu0 0.0
    %1282 = vmatprep.subr.mxu0 0.0
    %1283 = vmatpush1.msra.mxu0 0.0
    %1284 = vmatprep.subr.mxu0 0.0
    %1285 = vmatpush1.msra.mxu0 0.0
    %1286 = vmatprep.subr.mxu0 0.0
    %1287 = vmatpush1.msra.mxu0 0.0
    %1288 = vmatprep.subr.mxu0 0.0
    %1289 = vmatpush1.msra.mxu0 0.0
    %1290 = vmatprep.subr.mxu0 0.0
    %1291 = vmatpush1.msra.mxu0 0.0
    %1292 = vmatprep.subr.mxu0 0.0
    %1293 = vmatpush1.msra.mxu0 0.0
    %1294 = vmatprep.subr.mxu0 0.0
    %1295 = vmatpush1.msra.mxu0 0.0
    %1296 = vmatprep.subr.mxu0 0.0
    %1297 = vmatpush1.msra.mxu0 0.0
    %1298 = vmatprep.subr.mxu0 0.0
    %1299 = vmatpush1.msra.mxu0 0.0
    %1300 = vmatprep.subr.mxu0 0.0
    %1301 = vmatpush1.msra.mxu0 0.0
    %1302 = vmatprep.subr.mxu0 0.0
    %1303 = vmatpush1.msra.mxu0 0.0
    %1304 = vmatprep.subr.mxu0 0.0
    %1305 = vmatpush1.msra.mxu0 0.0
    %1306 = vmatprep.subr.mxu0 0.0
    %1307 = vmatpush1.msra.mxu0 0.0
    %1308 = vmatprep.subr.mxu0 0.0
    %1309 = vmatpush1.msra.mxu0 0.0
    %1310 = vmatprep.subr.mxu0 0.0
    %1311 = vmatpush1.msra.mxu0 0.0
    %1312 = vmatprep.mubr.f32.mxu0 0.0
    %v1313 = vand.u32 %v1123, 4294901760
    %1314 = vmatmul.mubr.f32.gmra.mrb[0].mxu0 %v1313
    %v1315 = vpop.f32.mrb[0].mxu0
    %v1316 = vadd.f32 %v1205, %v1315
    %v1317 = vpop.f32.mrb[0].mxu0
    %1318 = vdwg.mxu0
    %1319 = vmatprep.subr.mxu0 0.0
    %v1320 = vand.u32 %v12, 4294901760
    %v1321 = vsub.f32 %v12, %v1320
    %1322 = vmatpush1.msra.mxu0 %v1321
    %1323 = vmatprep.subr.mxu0 0.0
    %v1324 = vand.u32 %v13, 4294901760
    %v1325 = vsub.f32 %v13, %v1324
    %1326 = vmatpush1.msra.mxu0 %v1325
    %1327 = vmatprep.subr.mxu0 0.0
    %v1328 = vand.u32 %v14, 4294901760
    %v1329 = vsub.f32 %v14, %v1328
    %1330 = vmatpush1.msra.mxu0 %v1329
    %1331 = vmatprep.subr.mxu0 0.0
    %v1332 = vand.u32 %v15, 4294901760
    %v1333 = vsub.f32 %v15, %v1332
    %1334 = vmatpush1.msra.mxu0 %v1333
    %1335 = vmatprep.subr.mxu0 0.0
    %v1336 = vand.u32 %v16, 4294901760
    %v1337 = vsub.f32 %v16, %v1336
    %1338 = vmatpush1.msra.mxu0 %v1337
    %1339 = vmatprep.subr.mxu0 0.0
    %v1340 = vand.u32 %v17, 4294901760
    %v1341 = vsub.f32 %v17, %v1340
    %1342 = vmatpush1.msra.mxu0 %v1341
    %1343 = vmatprep.subr.mxu0 0.0
    %v1344 = vand.u32 %v18, 4294901760
    %v1345 = vsub.f32 %v18, %v1344
    %1346 = vmatpush1.msra.mxu0 %v1345
    %1347 = vmatprep.subr.mxu0 0.0
    %v1348 = vand.u32 %v19, 4294901760
    %v1349 = vsub.f32 %v19, %v1348
    %1350 = vmatpush1.msra.mxu0 %v1349
    %1351 = vmatprep.subr.mxu0 0.0
    %1352 = vmatpush1.msra.mxu0 0.0
    %1353 = vmatprep.subr.mxu0 0.0
    %1354 = vmatpush1.msra.mxu0 0.0
    %1355 = vmatprep.subr.mxu0 0.0
    %1356 = vmatpush1.msra.mxu0 0.0
    %1357 = vmatprep.subr.mxu0 0.0
    %1358 = vmatpush1.msra.mxu0 0.0
    %1359 = vmatprep.subr.mxu0 0.0
    %1360 = vmatpush1.msra.mxu0 0.0
    %1361 = vmatprep.subr.mxu0 0.0
    %1362 = vmatpush1.msra.mxu0 0.0
    %1363 = vmatprep.subr.mxu0 0.0
    %1364 = vmatpush1.msra.mxu0 0.0
    %1365 = vmatprep.subr.mxu0 0.0
    %1366 = vmatpush1.msra.mxu0 0.0
    %1367 = vmatprep.subr.mxu0 0.0
    %1368 = vmatpush1.msra.mxu0 0.0
    %1369 = vmatprep.subr.mxu0 0.0
    %1370 = vmatpush1.msra.mxu0 0.0
    %1371 = vmatprep.subr.mxu0 0.0
    %1372 = vmatpush1.msra.mxu0 0.0
    %1373 = vmatprep.subr.mxu0 0.0
    %1374 = vmatpush1.msra.mxu0 0.0
    %1375 = vmatprep.subr.mxu0 0.0
    %1376 = vmatpush1.msra.mxu0 0.0
    %1377 = vmatprep.subr.mxu0 0.0
    %1378 = vmatpush1.msra.mxu0 0.0
    %1379 = vmatprep.subr.mxu0 0.0
    %1380 = vmatpush1.msra.mxu0 0.0
    %1381 = vmatprep.subr.mxu0 0.0
    %1382 = vmatpush1.msra.mxu0 0.0
    %1383 = vmatprep.subr.mxu0 0.0
    %1384 = vmatpush1.msra.mxu0 0.0
    %1385 = vmatprep.subr.mxu0 0.0
    %1386 = vmatpush1.msra.mxu0 0.0
    %1387 = vmatprep.subr.mxu0 0.0
    %1388 = vmatpush1.msra.mxu0 0.0
    %1389 = vmatprep.subr.mxu0 0.0
    %1390 = vmatpush1.msra.mxu0 0.0
    %1391 = vmatprep.subr.mxu0 0.0
    %1392 = vmatpush1.msra.mxu0 0.0
    %1393 = vmatprep.subr.mxu0 0.0
    %1394 = vmatpush1.msra.mxu0 0.0
    %1395 = vmatprep.subr.mxu0 0.0
    %1396 = vmatpush1.msra.mxu0 0.0
    %1397 = vmatprep.subr.mxu0 0.0
    %1398 = vmatpush1.msra.mxu0 0.0
    %1399 = vmatprep.mubr.f32.mxu0 0.0
    %v1400 = vand.u32 %v1123, 4294901760
    %v1401 = vsub.f32 %v1123, %v1400
    %1402 = vmatmul.mubr.f32.gmra.mrb[0].mxu0 %v1401
    %v1403 = vpop.f32.mrb[0].mxu0
    %v1404 = vadd.f32 %v1316, %v1403
    %v1405 = vpop.f32.mrb[0].mxu0
    %1406 = vdwg.mxu0
    %1407 = vmatprep.subr.mxu0 0.0
    %v1408 = vand.u32 %v12, 4294901760
    %1409 = vmatpush1.msra.mxu0 %v1408
    %1410 = vmatprep.subr.mxu0 0.0
    %v1411 = vand.u32 %v13, 4294901760
    %1412 = vmatpush1.msra.mxu0 %v1411
    %1413 = vmatprep.subr.mxu0 0.0
    %v1414 = vand.u32 %v14, 4294901760
    %1415 = vmatpush1.msra.mxu0 %v1414
    %1416 = vmatprep.subr.mxu0 0.0
    %v1417 = vand.u32 %v15, 4294901760
    %1418 = vmatpush1.msra.mxu0 %v1417
    %1419 = vmatprep.subr.mxu0 0.0
    %v1420 = vand.u32 %v16, 4294901760
    %1421 = vmatpush1.msra.mxu0 %v1420
    %1422 = vmatprep.subr.mxu0 0.0
    %v1423 = vand.u32 %v17, 4294901760
    %1424 = vmatpush1.msra.mxu0 %v1423
    %1425 = vmatprep.subr.mxu0 0.0
    %v1426 = vand.u32 %v18, 4294901760
    %1427 = vmatpush1.msra.mxu0 %v1426
    %1428 = vmatprep.subr.mxu0 0.0
    %v1429 = vand.u32 %v19, 4294901760
    %1430 = vmatpush1.msra.mxu0 %v1429
    %1431 = vmatprep.subr.mxu0 0.0
    %1432 = vmatpush1.msra.mxu0 0.0
    %1433 = vmatprep.subr.mxu0 0.0
    %1434 = vmatpush1.msra.mxu0 0.0
    %1435 = vmatprep.subr.mxu0 0.0
    %1436 = vmatpush1.msra.mxu0 0.0
    %1437 = vmatprep.subr.mxu0 0.0
    %1438 = vmatpush1.msra.mxu0 0.0
    %1439 = vmatprep.subr.mxu0 0.0
    %1440 = vmatpush1.msra.mxu0 0.0
    %1441 = vmatprep.subr.mxu0 0.0
    %1442 = vmatpush1.msra.mxu0 0.0
    %1443 = vmatprep.subr.mxu0 0.0
    %1444 = vmatpush1.msra.mxu0 0.0
    %1445 = vmatprep.subr.mxu0 0.0
    %1446 = vmatpush1.msra.mxu0 0.0
    %1447 = vmatprep.subr.mxu0 0.0
    %1448 = vmatpush1.msra.mxu0 0.0
    %1449 = vmatprep.subr.mxu0 0.0
    %1450 = vmatpush1.msra.mxu0 0.0
    %1451 = vmatprep.subr.mxu0 0.0
    %1452 = vmatpush1.msra.mxu0 0.0
    %1453 = vmatprep.subr.mxu0 0.0
    %1454 = vmatpush1.msra.mxu0 0.0
    %1455 = vmatprep.subr.mxu0 0.0
    %1456 = vmatpush1.msra.mxu0 0.0
    %1457 = vmatprep.subr.mxu0 0.0
    %1458 = vmatpush1.msra.mxu0 0.0
    %1459 = vmatprep.subr.mxu0 0.0
    %1460 = vmatpush1.msra.mxu0 0.0
    %1461 = vmatprep.subr.mxu0 0.0
    %1462 = vmatpush1.msra.mxu0 0.0
    %1463 = vmatprep.subr.mxu0 0.0
    %1464 = vmatpush1.msra.mxu0 0.0
    %1465 = vmatprep.subr.mxu0 0.0
    %1466 = vmatpush1.msra.mxu0 0.0
    %1467 = vmatprep.subr.mxu0 0.0
    %1468 = vmatpush1.msra.mxu0 0.0
    %1469 = vmatprep.subr.mxu0 0.0
    %1470 = vmatpush1.msra.mxu0 0.0
    %1471 = vmatprep.subr.mxu0 0.0
    %1472 = vmatpush1.msra.mxu0 0.0
    %1473 = vmatprep.subr.mxu0 0.0
    %1474 = vmatpush1.msra.mxu0 0.0
    %1475 = vmatprep.subr.mxu0 0.0
    %1476 = vmatpush1.msra.mxu0 0.0
    %1477 = vmatprep.subr.mxu0 0.0
    %1478 = vmatpush1.msra.mxu0 0.0
    %1479 = vmatprep.mubr.f32.mxu0 0.0
    %v1480 = vand.u32 %v1123, 4294901760
    %v1481 = vsub.f32 %v1123, %v1480
    %v1482 = vand.u32 %v1481, 4294901760
    %1483 = vmatmul.mubr.f32.gmra.mrb[0].mxu0 %v1482
    %v1484 = vpop.f32.mrb[0].mxu0
    %v1485 = vadd.f32 %v1404, %v1484
    %v1486 = vpop.f32.mrb[0].mxu0
    %1487 = vdwg.mxu0
    %1488 = vmatprep.subr.mxu0 0.0
    %v1489 = vand.u32 %v12, 4294901760
    %v1490 = vsub.f32 %v12, %v1489
    %v1491 = vand.u32 %v1490, 4294901760
    %1492 = vmatpush1.msra.mxu0 %v1491
    %1493 = vmatprep.subr.mxu0 0.0
    %v1494 = vand.u32 %v13, 4294901760
    %v1495 = vsub.f32 %v13, %v1494
    %v1496 = vand.u32 %v1495, 4294901760
    %1497 = vmatpush1.msra.mxu0 %v1496
    %1498 = vmatprep.subr.mxu0 0.0
    %v1499 = vand.u32 %v14, 4294901760
    %v1500 = vsub.f32 %v14, %v1499
    %v1501 = vand.u32 %v1500, 4294901760
    %1502 = vmatpush1.msra.mxu0 %v1501
    %1503 = vmatprep.subr.mxu0 0.0
    %v1504 = vand.u32 %v15, 4294901760
    %v1505 = vsub.f32 %v15, %v1504
    %v1506 = vand.u32 %v1505, 4294901760
    %1507 = vmatpush1.msra.mxu0 %v1506
    %1508 = vmatprep.subr.mxu0 0.0
    %v1509 = vand.u32 %v16, 4294901760
    %v1510 = vsub.f32 %v16, %v1509
    %v1511 = vand.u32 %v1510, 4294901760
    %1512 = vmatpush1.msra.mxu0 %v1511
    %1513 = vmatprep.subr.mxu0 0.0
    %v1514 = vand.u32 %v17, 4294901760
    %v1515 = vsub.f32 %v17, %v1514
    %v1516 = vand.u32 %v1515, 4294901760
    %1517 = vmatpush1.msra.mxu0 %v1516
    %1518 = vmatprep.subr.mxu0 0.0
    %v1519 = vand.u32 %v18, 4294901760
    %v1520 = vsub.f32 %v18, %v1519
    %v1521 = vand.u32 %v1520, 4294901760
    %1522 = vmatpush1.msra.mxu0 %v1521
    %1523 = vmatprep.subr.mxu0 0.0
    %v1524 = vand.u32 %v19, 4294901760
    %v1525 = vsub.f32 %v19, %v1524
    %v1526 = vand.u32 %v1525, 4294901760
    %1527 = vmatpush1.msra.mxu0 %v1526
    %1528 = vmatprep.subr.mxu0 0.0
    %1529 = vmatpush1.msra.mxu0 0.0
    %1530 = vmatprep.subr.mxu0 0.0
    %1531 = vmatpush1.msra.mxu0 0.0
    %1532 = vmatprep.subr.mxu0 0.0
    %1533 = vmatpush1.msra.mxu0 0.0
    %1534 = vmatprep.subr.mxu0 0.0
    %1535 = vmatpush1.msra.mxu0 0.0
    %1536 = vmatprep.subr.mxu0 0.0
    %1537 = vmatpush1.msra.mxu0 0.0
    %1538 = vmatprep.subr.mxu0 0.0
    %1539 = vmatpush1.msra.mxu0 0.0
    %1540 = vmatprep.subr.mxu0 0.0
    %1541 = vmatpush1.msra.mxu0 0.0
    %1542 = vmatprep.subr.mxu0 0.0
    %1543 = vmatpush1.msra.mxu0 0.0
    %1544 = vmatprep.subr.mxu0 0.0
    %1545 = vmatpush1.msra.mxu0 0.0
    %1546 = vmatprep.subr.mxu0 0.0
    %1547 = vmatpush1.msra.mxu0 0.0
    %1548 = vmatprep.subr.mxu0 0.0
    %1549 = vmatpush1.msra.mxu0 0.0
    %1550 = vmatprep.subr.mxu0 0.0
    %1551 = vmatpush1.msra.mxu0 0.0
    %1552 = vmatprep.subr.mxu0 0.0
    %1553 = vmatpush1.msra.mxu0 0.0
    %1554 = vmatprep.subr.mxu0 0.0
    %1555 = vmatpush1.msra.mxu0 0.0
    %1556 = vmatprep.subr.mxu0 0.0
    %1557 = vmatpush1.msra.mxu0 0.0
    %1558 = vmatprep.subr.mxu0 0.0
    %1559 = vmatpush1.msra.mxu0 0.0
    %1560 = vmatprep.subr.mxu0 0.0
    %1561 = vmatpush1.msra.mxu0 0.0
    %1562 = vmatprep.subr.mxu0 0.0
    %1563 = vmatpush1.msra.mxu0 0.0
    %1564 = vmatprep.subr.mxu0 0.0
    %1565 = vmatpush1.msra.mxu0 0.0
    %1566 = vmatprep.subr.mxu0 0.0
    %1567 = vmatpush1.msra.mxu0 0.0
    %1568 = vmatprep.subr.mxu0 0.0
    %1569 = vmatpush1.msra.mxu0 0.0
    %1570 = vmatprep.subr.mxu0 0.0
    %1571 = vmatpush1.msra.mxu0 0.0
    %1572 = vmatprep.subr.mxu0 0.0
    %1573 = vmatpush1.msra.mxu0 0.0
    %1574 = vmatprep.subr.mxu0 0.0
    %1575 = vmatpush1.msra.mxu0 0.0
    %1576 = vmatprep.mubr.f32.mxu0 0.0
    %v1577 = vand.u32 %v1123, 4294901760
    %1578 = vmatmul.mubr.f32.gmra.mrb[0].mxu0 %v1577
    %v1579 = vpop.f32.mrb[0].mxu0
    %v1580 = vadd.f32 %v1485, %v1579
    %v1581 = vpop.f32.mrb[0].mxu0
    %1582 = vdwg.mxu0
    %1583 = vmatprep.subr.mxu0 0.0
    %v1584 = vand.u32 %v12, 4294901760
    %1585 = vmatpush1.msra.mxu0 %v1584
    %1586 = vmatprep.subr.mxu0 0.0
    %v1587 = vand.u32 %v13, 4294901760
    %1588 = vmatpush1.msra.mxu0 %v1587
    %1589 = vmatprep.subr.mxu0 0.0
    %v1590 = vand.u32 %v14, 4294901760
    %1591 = vmatpush1.msra.mxu0 %v1590
    %1592 = vmatprep.subr.mxu0 0.0
    %v1593 = vand.u32 %v15, 4294901760
    %1594 = vmatpush1.msra.mxu0 %v1593
    %1595 = vmatprep.subr.mxu0 0.0
    %v1596 = vand.u32 %v16, 4294901760
    %1597 = vmatpush1.msra.mxu0 %v1596
    %1598 = vmatprep.subr.mxu0 0.0
    %v1599 = vand.u32 %v17, 4294901760
    %1600 = vmatpush1.msra.mxu0 %v1599
    %1601 = vmatprep.subr.mxu0 0.0
    %v1602 = vand.u32 %v18, 4294901760
    %1603 = vmatpush1.msra.mxu0 %v1602
    %1604 = vmatprep.subr.mxu0 0.0
    %v1605 = vand.u32 %v19, 4294901760
    %1606 = vmatpush1.msra.mxu0 %v1605
    %1607 = vmatprep.subr.mxu0 0.0
    %1608 = vmatpush1.msra.mxu0 0.0
    %1609 = vmatprep.subr.mxu0 0.0
    %1610 = vmatpush1.msra.mxu0 0.0
    %1611 = vmatprep.subr.mxu0 0.0
    %1612 = vmatpush1.msra.mxu0 0.0
    %1613 = vmatprep.subr.mxu0 0.0
    %1614 = vmatpush1.msra.mxu0 0.0
    %1615 = vmatprep.subr.mxu0 0.0
    %1616 = vmatpush1.msra.mxu0 0.0
    %1617 = vmatprep.subr.mxu0 0.0
    %1618 = vmatpush1.msra.mxu0 0.0
    %1619 = vmatprep.subr.mxu0 0.0
    %1620 = vmatpush1.msra.mxu0 0.0
    %1621 = vmatprep.subr.mxu0 0.0
    %1622 = vmatpush1.msra.mxu0 0.0
    %1623 = vmatprep.subr.mxu0 0.0
    %1624 = vmatpush1.msra.mxu0 0.0
    %1625 = vmatprep.subr.mxu0 0.0
    %1626 = vmatpush1.msra.mxu0 0.0
    %1627 = vmatprep.subr.mxu0 0.0
    %1628 = vmatpush1.msra.mxu0 0.0
    %1629 = vmatprep.subr.mxu0 0.0
    %1630 = vmatpush1.msra.mxu0 0.0
    %1631 = vmatprep.subr.mxu0 0.0
    %1632 = vmatpush1.msra.mxu0 0.0
    %1633 = vmatprep.subr.mxu0 0.0
    %1634 = vmatpush1.msra.mxu0 0.0
    %1635 = vmatprep.subr.mxu0 0.0
    %1636 = vmatpush1.msra.mxu0 0.0
    %1637 = vmatprep.subr.mxu0 0.0
    %1638 = vmatpush1.msra.mxu0 0.0
    %1639 = vmatprep.subr.mxu0 0.0
    %1640 = vmatpush1.msra.mxu0 0.0
    %1641 = vmatprep.subr.mxu0 0.0
    %1642 = vmatpush1.msra.mxu0 0.0
    %1643 = vmatprep.subr.mxu0 0.0
    %1644 = vmatpush1.msra.mxu0 0.0
    %1645 = vmatprep.subr.mxu0 0.0
    %1646 = vmatpush1.msra.mxu0 0.0
    %1647 = vmatprep.subr.mxu0 0.0
    %1648 = vmatpush1.msra.mxu0 0.0
    %1649 = vmatprep.subr.mxu0 0.0
    %1650 = vmatpush1.msra.mxu0 0.0
    %1651 = vmatprep.subr.mxu0 0.0
    %1652 = vmatpush1.msra.mxu0 0.0
    %1653 = vmatprep.subr.mxu0 0.0
    %1654 = vmatpush1.msra.mxu0 0.0
    %1655 = vmatprep.mubr.f32.mxu0 0.0
    %v1656 = vand.u32 %v1123, 4294901760
    %1657 = vmatmul.mubr.f32.gmra.mrb[0].mxu0 %v1656
    %v1658 = vpop.f32.mrb[0].mxu0
    %v1659 = vadd.f32 %v1580, %v1658
    %v1660 = vpop.f32.mrb[0].mxu0
    %1661 = vdwg.mxu0
    %1662 = vset.pattern.permute.xlu0 3
    %1663 = vperm.xlu0 %1662, %v22
    %v1664 = vpop.permute.xlu0 %1663
    %vm1665 = vcmp.eq.s32.totalorder %v21, %v1664
    %v1666 = vsel %vm1665, 1, 0
    %v1667 = vcvt.s32.f32 %v1666
    %v1669 = vsel %vm29, %v1667, 0
    %1671 = vmatprep.subr.mxu0 0.0
    %v1672 = vand.u32 %v12, 4294901760
    %1673 = vmatpush1.msra.mxu0 %v1672
    %1674 = vmatprep.subr.mxu0 0.0
    %v1675 = vand.u32 %v13, 4294901760
    %1676 = vmatpush1.msra.mxu0 %v1675
    %1677 = vmatprep.subr.mxu0 0.0
    %v1678 = vand.u32 %v14, 4294901760
    %1679 = vmatpush1.msra.mxu0 %v1678
    %1680 = vmatprep.subr.mxu0 0.0
    %v1681 = vand.u32 %v15, 4294901760
    %1682 = vmatpush1.msra.mxu0 %v1681
    %1683 = vmatprep.subr.mxu0 0.0
    %v1684 = vand.u32 %v16, 4294901760
    %1685 = vmatpush1.msra.mxu0 %v1684
    %1686 = vmatprep.subr.mxu0 0.0
    %v1687 = vand.u32 %v17, 4294901760
    %1688 = vmatpush1.msra.mxu0 %v1687
    %1689 = vmatprep.subr.mxu0 0.0
    %v1690 = vand.u32 %v18, 4294901760
    %1691 = vmatpush1.msra.mxu0 %v1690
    %1692 = vmatprep.subr.mxu0 0.0
    %v1693 = vand.u32 %v19, 4294901760
    %1694 = vmatpush1.msra.mxu0 %v1693
    %1695 = vmatprep.subr.mxu0 0.0
    %1696 = vmatpush1.msra.mxu0 0.0
    %1697 = vmatprep.subr.mxu0 0.0
    %1698 = vmatpush1.msra.mxu0 0.0
    %1699 = vmatprep.subr.mxu0 0.0
    %1700 = vmatpush1.msra.mxu0 0.0
    %1701 = vmatprep.subr.mxu0 0.0
    %1702 = vmatpush1.msra.mxu0 0.0
    %1703 = vmatprep.subr.mxu0 0.0
    %1704 = vmatpush1.msra.mxu0 0.0
    %1705 = vmatprep.subr.mxu0 0.0
    %1706 = vmatpush1.msra.mxu0 0.0
    %1707 = vmatprep.subr.mxu0 0.0
    %1708 = vmatpush1.msra.mxu0 0.0
    %1709 = vmatprep.subr.mxu0 0.0
    %1710 = vmatpush1.msra.mxu0 0.0
    %1711 = vmatprep.subr.mxu0 0.0
    %1712 = vmatpush1.msra.mxu0 0.0
    %1713 = vmatprep.subr.mxu0 0.0
    %1714 = vmatpush1.msra.mxu0 0.0
    %1715 = vmatprep.subr.mxu0 0.0
    %1716 = vmatpush1.msra.mxu0 0.0
    %1717 = vmatprep.subr.mxu0 0.0
    %1718 = vmatpush1.msra.mxu0 0.0
    %1719 = vmatprep.subr.mxu0 0.0
    %1720 = vmatpush1.msra.mxu0 0.0
    %1721 = vmatprep.subr.mxu0 0.0
    %1722 = vmatpush1.msra.mxu0 0.0
    %1723 = vmatprep.subr.mxu0 0.0
    %1724 = vmatpush1.msra.mxu0 0.0
    %1725 = vmatprep.subr.mxu0 0.0
    %1726 = vmatpush1.msra.mxu0 0.0
    %1727 = vmatprep.subr.mxu0 0.0
    %1728 = vmatpush1.msra.mxu0 0.0
    %1729 = vmatprep.subr.mxu0 0.0
    %1730 = vmatpush1.msra.mxu0 0.0
    %1731 = vmatprep.subr.mxu0 0.0
    %1732 = vmatpush1.msra.mxu0 0.0
    %1733 = vmatprep.subr.mxu0 0.0
    %1734 = vmatpush1.msra.mxu0 0.0
    %1735 = vmatprep.subr.mxu0 0.0
    %1736 = vmatpush1.msra.mxu0 0.0
    %1737 = vmatprep.subr.mxu0 0.0
    %1738 = vmatpush1.msra.mxu0 0.0
    %1739 = vmatprep.subr.mxu0 0.0
    %1740 = vmatpush1.msra.mxu0 0.0
    %1741 = vmatprep.subr.mxu0 0.0
    %1742 = vmatpush1.msra.mxu0 0.0
    %1743 = vmatprep.mubr.f32.mxu0 0.0
    %v1744 = vand.u32 %v1669, 4294901760
    %v1745 = vsub.f32 %v1669, %v1744
    %v1746 = vand.u32 %v1745, 4294901760
    %v1747 = vsub.f32 %v1745, %v1746
    %v1748 = vand.u32 %v1747, 4294901760
    %1749 = vmatmul.mubr.f32.gmra.mrb[0].mxu0 %v1748
    %v1750 = vpop.f32.mrb[0].mxu0
    %v1751 = vadd.f32 0.0, %v1750
    %v1752 = vpop.f32.mrb[0].mxu0
    %1753 = vdwg.mxu0
    %1754 = vmatprep.subr.mxu0 0.0
    %v1755 = vand.u32 %v12, 4294901760
    %v1756 = vsub.f32 %v12, %v1755
    %v1757 = vand.u32 %v1756, 4294901760
    %v1758 = vsub.f32 %v1756, %v1757
    %v1759 = vand.u32 %v1758, 4294901760
    %1760 = vmatpush1.msra.mxu0 %v1759
    %1761 = vmatprep.subr.mxu0 0.0
    %v1762 = vand.u32 %v13, 4294901760
    %v1763 = vsub.f32 %v13, %v1762
    %v1764 = vand.u32 %v1763, 4294901760
    %v1765 = vsub.f32 %v1763, %v1764
    %v1766 = vand.u32 %v1765, 4294901760
    %1767 = vmatpush1.msra.mxu0 %v1766
    %1768 = vmatprep.subr.mxu0 0.0
    %v1769 = vand.u32 %v14, 4294901760
    %v1770 = vsub.f32 %v14, %v1769
    %v1771 = vand.u32 %v1770, 4294901760
    %v1772 = vsub.f32 %v1770, %v1771
    %v1773 = vand.u32 %v1772, 4294901760
    %1774 = vmatpush1.msra.mxu0 %v1773
    %1775 = vmatprep.subr.mxu0 0.0
    %v1776 = vand.u32 %v15, 4294901760
    %v1777 = vsub.f32 %v15, %v1776
    %v1778 = vand.u32 %v1777, 4294901760
    %v1779 = vsub.f32 %v1777, %v1778
    %v1780 = vand.u32 %v1779, 4294901760
    %1781 = vmatpush1.msra.mxu0 %v1780
    %1782 = vmatprep.subr.mxu0 0.0
    %v1783 = vand.u32 %v16, 4294901760
    %v1784 = vsub.f32 %v16, %v1783
    %v1785 = vand.u32 %v1784, 4294901760
    %v1786 = vsub.f32 %v1784, %v1785
    %v1787 = vand.u32 %v1786, 4294901760
    %1788 = vmatpush1.msra.mxu0 %v1787
    %1789 = vmatprep.subr.mxu0 0.0
    %v1790 = vand.u32 %v17, 4294901760
    %v1791 = vsub.f32 %v17, %v1790
    %v1792 = vand.u32 %v1791, 4294901760
    %v1793 = vsub.f32 %v1791, %v1792
    %v1794 = vand.u32 %v1793, 4294901760
    %1795 = vmatpush1.msra.mxu0 %v1794
    %1796 = vmatprep.subr.mxu0 0.0
    %v1797 = vand.u32 %v18, 4294901760
    %v1798 = vsub.f32 %v18, %v1797
    %v1799 = vand.u32 %v1798, 4294901760
    %v1800 = vsub.f32 %v1798, %v1799
    %v1801 = vand.u32 %v1800, 4294901760
    %1802 = vmatpush1.msra.mxu0 %v1801
    %1803 = vmatprep.subr.mxu0 0.0
    %v1804 = vand.u32 %v19, 4294901760
    %v1805 = vsub.f32 %v19, %v1804
    %v1806 = vand.u32 %v1805, 4294901760
    %v1807 = vsub.f32 %v1805, %v1806
    %v1808 = vand.u32 %v1807, 4294901760
    %1809 = vmatpush1.msra.mxu0 %v1808
    %1810 = vmatprep.subr.mxu0 0.0
    %1811 = vmatpush1.msra.mxu0 0.0
    %1812 = vmatprep.subr.mxu0 0.0
    %1813 = vmatpush1.msra.mxu0 0.0
    %1814 = vmatprep.subr.mxu0 0.0
    %1815 = vmatpush1.msra.mxu0 0.0
    %1816 = vmatprep.subr.mxu0 0.0
    %1817 = vmatpush1.msra.mxu0 0.0
    %1818 = vmatprep.subr.mxu0 0.0
    %1819 = vmatpush1.msra.mxu0 0.0
    %1820 = vmatprep.subr.mxu0 0.0
    %1821 = vmatpush1.msra.mxu0 0.0
    %1822 = vmatprep.subr.mxu0 0.0
    %1823 = vmatpush1.msra.mxu0 0.0
    %1824 = vmatprep.subr.mxu0 0.0
    %1825 = vmatpush1.msra.mxu0 0.0
    %1826 = vmatprep.subr.mxu0 0.0
    %1827 = vmatpush1.msra.mxu0 0.0
    %1828 = vmatprep.subr.mxu0 0.0
    %1829 = vmatpush1.msra.mxu0 0.0
    %1830 = vmatprep.subr.mxu0 0.0
    %1831 = vmatpush1.msra.mxu0 0.0
    %1832 = vmatprep.subr.mxu0 0.0
    %1833 = vmatpush1.msra.mxu0 0.0
    %1834 = vmatprep.subr.mxu0 0.0
    %1835 = vmatpush1.msra.mxu0 0.0
    %1836 = vmatprep.subr.mxu0 0.0
    %1837 = vmatpush1.msra.mxu0 0.0
    %1838 = vmatprep.subr.mxu0 0.0
    %1839 = vmatpush1.msra.mxu0 0.0
    %1840 = vmatprep.subr.mxu0 0.0
    %1841 = vmatpush1.msra.mxu0 0.0
    %1842 = vmatprep.subr.mxu0 0.0
    %1843 = vmatpush1.msra.mxu0 0.0
    %1844 = vmatprep.subr.mxu0 0.0
    %1845 = vmatpush1.msra.mxu0 0.0
    %1846 = vmatprep.subr.mxu0 0.0
    %1847 = vmatpush1.msra.mxu0 0.0
    %1848 = vmatprep.subr.mxu0 0.0
    %1849 = vmatpush1.msra.mxu0 0.0
    %1850 = vmatprep.subr.mxu0 0.0
    %1851 = vmatpush1.msra.mxu0 0.0
    %1852 = vmatprep.subr.mxu0 0.0
    %1853 = vmatpush1.msra.mxu0 0.0
    %1854 = vmatprep.subr.mxu0 0.0
    %1855 = vmatpush1.msra.mxu0 0.0
    %1856 = vmatprep.subr.mxu0 0.0
    %1857 = vmatpush1.msra.mxu0 0.0
    %1858 = vmatprep.mubr.f32.mxu0 0.0
    %v1859 = vand.u32 %v1669, 4294901760
    %1860 = vmatmul.mubr.f32.gmra.mrb[0].mxu0 %v1859
    %v1861 = vpop.f32.mrb[0].mxu0
    %v1862 = vadd.f32 %v1751, %v1861
    %v1863 = vpop.f32.mrb[0].mxu0
    %1864 = vdwg.mxu0
    %1865 = vmatprep.subr.mxu0 0.0
    %v1866 = vand.u32 %v12, 4294901760
    %v1867 = vsub.f32 %v12, %v1866
    %1868 = vmatpush1.msra.mxu0 %v1867
    %1869 = vmatprep.subr.mxu0 0.0
    %v1870 = vand.u32 %v13, 4294901760
    %v1871 = vsub.f32 %v13, %v1870
    %1872 = vmatpush1.msra.mxu0 %v1871
    %1873 = vmatprep.subr.mxu0 0.0
    %v1874 = vand.u32 %v14, 4294901760
    %v1875 = vsub.f32 %v14, %v1874
    %1876 = vmatpush1.msra.mxu0 %v1875
    %1877 = vmatprep.subr.mxu0 0.0
    %v1878 = vand.u32 %v15, 4294901760
    %v1879 = vsub.f32 %v15, %v1878
    %1880 = vmatpush1.msra.mxu0 %v1879
    %1881 = vmatprep.subr.mxu0 0.0
    %v1882 = vand.u32 %v16, 4294901760
    %v1883 = vsub.f32 %v16, %v1882
    %1884 = vmatpush1.msra.mxu0 %v1883
    %1885 = vmatprep.subr.mxu0 0.0
    %v1886 = vand.u32 %v17, 4294901760
    %v1887 = vsub.f32 %v17, %v1886
    %1888 = vmatpush1.msra.mxu0 %v1887
    %1889 = vmatprep.subr.mxu0 0.0
    %v1890 = vand.u32 %v18, 4294901760
    %v1891 = vsub.f32 %v18, %v1890
    %1892 = vmatpush1.msra.mxu0 %v1891
    %1893 = vmatprep.subr.mxu0 0.0
    %v1894 = vand.u32 %v19, 4294901760
    %v1895 = vsub.f32 %v19, %v1894
    %1896 = vmatpush1.msra.mxu0 %v1895
    %1897 = vmatprep.subr.mxu0 0.0
    %1898 = vmatpush1.msra.mxu0 0.0
    %1899 = vmatprep.subr.mxu0 0.0
    %1900 = vmatpush1.msra.mxu0 0.0
    %1901 = vmatprep.subr.mxu0 0.0
    %1902 = vmatpush1.msra.mxu0 0.0
    %1903 = vmatprep.subr.mxu0 0.0
    %1904 = vmatpush1.msra.mxu0 0.0
    %1905 = vmatprep.subr.mxu0 0.0
    %1906 = vmatpush1.msra.mxu0 0.0
    %1907 = vmatprep.subr.mxu0 0.0
    %1908 = vmatpush1.msra.mxu0 0.0
    %1909 = vmatprep.subr.mxu0 0.0
    %1910 = vmatpush1.msra.mxu0 0.0
    %1911 = vmatprep.subr.mxu0 0.0
    %1912 = vmatpush1.msra.mxu0 0.0
    %1913 = vmatprep.subr.mxu0 0.0
    %1914 = vmatpush1.msra.mxu0 0.0
    %1915 = vmatprep.subr.mxu0 0.0
    %1916 = vmatpush1.msra.mxu0 0.0
    %1917 = vmatprep.subr.mxu0 0.0
    %1918 = vmatpush1.msra.mxu0 0.0
    %1919 = vmatprep.subr.mxu0 0.0
    %1920 = vmatpush1.msra.mxu0 0.0
    %1921 = vmatprep.subr.mxu0 0.0
    %1922 = vmatpush1.msra.mxu0 0.0
    %1923 = vmatprep.subr.mxu0 0.0
    %1924 = vmatpush1.msra.mxu0 0.0
    %1925 = vmatprep.subr.mxu0 0.0
    %1926 = vmatpush1.msra.mxu0 0.0
    %1927 = vmatprep.subr.mxu0 0.0
    %1928 = vmatpush1.msra.mxu0 0.0
    %1929 = vmatprep.subr.mxu0 0.0
    %1930 = vmatpush1.msra.mxu0 0.0
    %1931 = vmatprep.subr.mxu0 0.0
    %1932 = vmatpush1.msra.mxu0 0.0
    %1933 = vmatprep.subr.mxu0 0.0
    %1934 = vmatpush1.msra.mxu0 0.0
    %1935 = vmatprep.subr.mxu0 0.0
    %1936 = vmatpush1.msra.mxu0 0.0
    %1937 = vmatprep.subr.mxu0 0.0
    %1938 = vmatpush1.msra.mxu0 0.0
    %1939 = vmatprep.subr.mxu0 0.0
    %1940 = vmatpush1.msra.mxu0 0.0
    %1941 = vmatprep.subr.mxu0 0.0
    %1942 = vmatpush1.msra.mxu0 0.0
    %1943 = vmatprep.subr.mxu0 0.0
    %1944 = vmatpush1.msra.mxu0 0.0
    %1945 = vmatprep.mubr.f32.mxu0 0.0
    %v1946 = vand.u32 %v1669, 4294901760
    %v1947 = vsub.f32 %v1669, %v1946
    %1948 = vmatmul.mubr.f32.gmra.mrb[0].mxu0 %v1947
    %v1949 = vpop.f32.mrb[0].mxu0
    %v1950 = vadd.f32 %v1862, %v1949
    %v1951 = vpop.f32.mrb[0].mxu0
    %1952 = vdwg.mxu0
    %1953 = vmatprep.subr.mxu0 0.0
    %v1954 = vand.u32 %v12, 4294901760
    %1955 = vmatpush1.msra.mxu0 %v1954
    %1956 = vmatprep.subr.mxu0 0.0
    %v1957 = vand.u32 %v13, 4294901760
    %1958 = vmatpush1.msra.mxu0 %v1957
    %1959 = vmatprep.subr.mxu0 0.0
    %v1960 = vand.u32 %v14, 4294901760
    %1961 = vmatpush1.msra.mxu0 %v1960
    %1962 = vmatprep.subr.mxu0 0.0
    %v1963 = vand.u32 %v15, 4294901760
    %1964 = vmatpush1.msra.mxu0 %v1963
    %1965 = vmatprep.subr.mxu0 0.0
    %v1966 = vand.u32 %v16, 4294901760
    %1967 = vmatpush1.msra.mxu0 %v1966
    %1968 = vmatprep.subr.mxu0 0.0
    %v1969 = vand.u32 %v17, 4294901760
    %1970 = vmatpush1.msra.mxu0 %v1969
    %1971 = vmatprep.subr.mxu0 0.0
    %v1972 = vand.u32 %v18, 4294901760
    %1973 = vmatpush1.msra.mxu0 %v1972
    %1974 = vmatprep.subr.mxu0 0.0
    %v1975 = vand.u32 %v19, 4294901760
    %1976 = vmatpush1.msra.mxu0 %v1975
    %1977 = vmatprep.subr.mxu0 0.0
    %1978 = vmatpush1.msra.mxu0 0.0
    %1979 = vmatprep.subr.mxu0 0.0
    %1980 = vmatpush1.msra.mxu0 0.0
    %1981 = vmatprep.subr.mxu0 0.0
    %1982 = vmatpush1.msra.mxu0 0.0
    %1983 = vmatprep.subr.mxu0 0.0
    %1984 = vmatpush1.msra.mxu0 0.0
    %1985 = vmatprep.subr.mxu0 0.0
    %1986 = vmatpush1.msra.mxu0 0.0
    %1987 = vmatprep.subr.mxu0 0.0
    %1988 = vmatpush1.msra.mxu0 0.0
    %1989 = vmatprep.subr.mxu0 0.0
    %1990 = vmatpush1.msra.mxu0 0.0
    %1991 = vmatprep.subr.mxu0 0.0
    %1992 = vmatpush1.msra.mxu0 0.0
    %1993 = vmatprep.subr.mxu0 0.0
    %1994 = vmatpush1.msra.mxu0 0.0
    %1995 = vmatprep.subr.mxu0 0.0
    %1996 = vmatpush1.msra.mxu0 0.0
    %1997 = vmatprep.subr.mxu0 0.0
    %1998 = vmatpush1.msra.mxu0 0.0
    %1999 = vmatprep.subr.mxu0 0.0
    %2000 = vmatpush1.msra.mxu0 0.0
    %2001 = vmatprep.subr.mxu0 0.0
    %2002 = vmatpush1.msra.mxu0 0.0
    %2003 = vmatprep.subr.mxu0 0.0
    %2004 = vmatpush1.msra.mxu0 0.0
    %2005 = vmatprep.subr.mxu0 0.0
    %2006 = vmatpush1.msra.mxu0 0.0
    %2007 = vmatprep.subr.mxu0 0.0
    %2008 = vmatpush1.msra.mxu0 0.0
    %2009 = vmatprep.subr.mxu0 0.0
    %2010 = vmatpush1.msra.mxu0 0.0
    %2011 = vmatprep.subr.mxu0 0.0
    %2012 = vmatpush1.msra.mxu0 0.0
    %2013 = vmatprep.subr.mxu0 0.0
    %2014 = vmatpush1.msra.mxu0 0.0
    %2015 = vmatprep.subr.mxu0 0.0
    %2016 = vmatpush1.msra.mxu0 0.0
    %2017 = vmatprep.subr.mxu0 0.0
    %2018 = vmatpush1.msra.mxu0 0.0
    %2019 = vmatprep.subr.mxu0 0.0
    %2020 = vmatpush1.msra.mxu0 0.0
    %2021 = vmatprep.subr.mxu0 0.0
    %2022 = vmatpush1.msra.mxu0 0.0
    %2023 = vmatprep.subr.mxu0 0.0
    %2024 = vmatpush1.msra.mxu0 0.0
    %2025 = vmatprep.mubr.f32.mxu0 0.0
    %v2026 = vand.u32 %v1669, 4294901760
    %v2027 = vsub.f32 %v1669, %v2026
    %v2028 = vand.u32 %v2027, 4294901760
    %2029 = vmatmul.mubr.f32.gmra.mrb[0].mxu0 %v2028
    %v2030 = vpop.f32.mrb[0].mxu0
    %v2031 = vadd.f32 %v1950, %v2030
    %v2032 = vpop.f32.mrb[0].mxu0
    %2033 = vdwg.mxu0
    %2034 = vmatprep.subr.mxu0 0.0
    %v2035 = vand.u32 %v12, 4294901760
    %v2036 = vsub.f32 %v12, %v2035
    %v2037 = vand.u32 %v2036, 4294901760
    %2038 = vmatpush1.msra.mxu0 %v2037
    %2039 = vmatprep.subr.mxu0 0.0
    %v2040 = vand.u32 %v13, 4294901760
    %v2041 = vsub.f32 %v13, %v2040
    %v2042 = vand.u32 %v2041, 4294901760
    %2043 = vmatpush1.msra.mxu0 %v2042
    %2044 = vmatprep.subr.mxu0 0.0
    %v2045 = vand.u32 %v14, 4294901760
    %v2046 = vsub.f32 %v14, %v2045
    %v2047 = vand.u32 %v2046, 4294901760
    %2048 = vmatpush1.msra.mxu0 %v2047
    %2049 = vmatprep.subr.mxu0 0.0
    %v2050 = vand.u32 %v15, 4294901760
    %v2051 = vsub.f32 %v15, %v2050
    %v2052 = vand.u32 %v2051, 4294901760
    %2053 = vmatpush1.msra.mxu0 %v2052
    %2054 = vmatprep.subr.mxu0 0.0
    %v2055 = vand.u32 %v16, 4294901760
    %v2056 = vsub.f32 %v16, %v2055
    %v2057 = vand.u32 %v2056, 4294901760
    %2058 = vmatpush1.msra.mxu0 %v2057
    %2059 = vmatprep.subr.mxu0 0.0
    %v2060 = vand.u32 %v17, 4294901760
    %v2061 = vsub.f32 %v17, %v2060
    %v2062 = vand.u32 %v2061, 4294901760
    %2063 = vmatpush1.msra.mxu0 %v2062
    %2064 = vmatprep.subr.mxu0 0.0
    %v2065 = vand.u32 %v18, 4294901760
    %v2066 = vsub.f32 %v18, %v2065
    %v2067 = vand.u32 %v2066, 4294901760
    %2068 = vmatpush1.msra.mxu0 %v2067
    %2069 = vmatprep.subr.mxu0 0.0
    %v2070 = vand.u32 %v19, 4294901760
    %v2071 = vsub.f32 %v19, %v2070
    %v2072 = vand.u32 %v2071, 4294901760
    %2073 = vmatpush1.msra.mxu0 %v2072
    %2074 = vmatprep.subr.mxu0 0.0
    %2075 = vmatpush1.msra.mxu0 0.0
    %2076 = vmatprep.subr.mxu0 0.0
    %2077 = vmatpush1.msra.mxu0 0.0
    %2078 = vmatprep.subr.mxu0 0.0
    %2079 = vmatpush1.msra.mxu0 0.0
    %2080 = vmatprep.subr.mxu0 0.0
    %2081 = vmatpush1.msra.mxu0 0.0
    %2082 = vmatprep.subr.mxu0 0.0
    %2083 = vmatpush1.msra.mxu0 0.0
    %2084 = vmatprep.subr.mxu0 0.0
    %2085 = vmatpush1.msra.mxu0 0.0
    %2086 = vmatprep.subr.mxu0 0.0
    %2087 = vmatpush1.msra.mxu0 0.0
    %2088 = vmatprep.subr.mxu0 0.0
    %2089 = vmatpush1.msra.mxu0 0.0
    %2090 = vmatprep.subr.mxu0 0.0
    %2091 = vmatpush1.msra.mxu0 0.0
    %2092 = vmatprep.subr.mxu0 0.0
    %2093 = vmatpush1.msra.mxu0 0.0
    %2094 = vmatprep.subr.mxu0 0.0
    %2095 = vmatpush1.msra.mxu0 0.0
    %2096 = vmatprep.subr.mxu0 0.0
    %2097 = vmatpush1.msra.mxu0 0.0
    %2098 = vmatprep.subr.mxu0 0.0
    %2099 = vmatpush1.msra.mxu0 0.0
    %2100 = vmatprep.subr.mxu0 0.0
    %2101 = vmatpush1.msra.mxu0 0.0
    %2102 = vmatprep.subr.mxu0 0.0
    %2103 = vmatpush1.msra.mxu0 0.0
    %2104 = vmatprep.subr.mxu0 0.0
    %2105 = vmatpush1.msra.mxu0 0.0
    %2106 = vmatprep.subr.mxu0 0.0
    %2107 = vmatpush1.msra.mxu0 0.0
    %2108 = vmatprep.subr.mxu0 0.0
    %2109 = vmatpush1.msra.mxu0 0.0
    %2110 = vmatprep.subr.mxu0 0.0
    %2111 = vmatpush1.msra.mxu0 0.0
    %2112 = vmatprep.subr.mxu0 0.0
    %2113 = vmatpush1.msra.mxu0 0.0
    %2114 = vmatprep.subr.mxu0 0.0
    %2115 = vmatpush1.msra.mxu0 0.0
    %2116 = vmatprep.subr.mxu0 0.0
    %2117 = vmatpush1.msra.mxu0 0.0
    %2118 = vmatprep.subr.mxu0 0.0
    %2119 = vmatpush1.msra.mxu0 0.0
    %2120 = vmatprep.subr.mxu0 0.0
    %2121 = vmatpush1.msra.mxu0 0.0
    %2122 = vmatprep.mubr.f32.mxu0 0.0
    %v2123 = vand.u32 %v1669, 4294901760
    %2124 = vmatmul.mubr.f32.gmra.mrb[0].mxu0 %v2123
    %v2125 = vpop.f32.mrb[0].mxu0
    %v2126 = vadd.f32 %v2031, %v2125
    %v2127 = vpop.f32.mrb[0].mxu0
    %2128 = vdwg.mxu0
    %2129 = vmatprep.subr.mxu0 0.0
    %v2130 = vand.u32 %v12, 4294901760
    %2131 = vmatpush1.msra.mxu0 %v2130
    %2132 = vmatprep.subr.mxu0 0.0
    %v2133 = vand.u32 %v13, 4294901760
    %2134 = vmatpush1.msra.mxu0 %v2133
    %2135 = vmatprep.subr.mxu0 0.0
    %v2136 = vand.u32 %v14, 4294901760
    %2137 = vmatpush1.msra.mxu0 %v2136
    %2138 = vmatprep.subr.mxu0 0.0
    %v2139 = vand.u32 %v15, 4294901760
    %2140 = vmatpush1.msra.mxu0 %v2139
    %2141 = vmatprep.subr.mxu0 0.0
    %v2142 = vand.u32 %v16, 4294901760
    %2143 = vmatpush1.msra.mxu0 %v2142
    %2144 = vmatprep.subr.mxu0 0.0
    %v2145 = vand.u32 %v17, 4294901760
    %2146 = vmatpush1.msra.mxu0 %v2145
    %2147 = vmatprep.subr.mxu0 0.0
    %v2148 = vand.u32 %v18, 4294901760
    %2149 = vmatpush1.msra.mxu0 %v2148
    %2150 = vmatprep.subr.mxu0 0.0
    %v2151 = vand.u32 %v19, 4294901760
    %2152 = vmatpush1.msra.mxu0 %v2151
    %2153 = vmatprep.subr.mxu0 0.0
    %2154 = vmatpush1.msra.mxu0 0.0
    %2155 = vmatprep.subr.mxu0 0.0
    %2156 = vmatpush1.msra.mxu0 0.0
    %2157 = vmatprep.subr.mxu0 0.0
    %2158 = vmatpush1.msra.mxu0 0.0
    %2159 = vmatprep.subr.mxu0 0.0
    %2160 = vmatpush1.msra.mxu0 0.0
    %2161 = vmatprep.subr.mxu0 0.0
    %2162 = vmatpush1.msra.mxu0 0.0
    %2163 = vmatprep.subr.mxu0 0.0
    %2164 = vmatpush1.msra.mxu0 0.0
    %2165 = vmatprep.subr.mxu0 0.0
    %2166 = vmatpush1.msra.mxu0 0.0
    %2167 = vmatprep.subr.mxu0 0.0
    %2168 = vmatpush1.msra.mxu0 0.0
    %2169 = vmatprep.subr.mxu0 0.0
    %2170 = vmatpush1.msra.mxu0 0.0
    %2171 = vmatprep.subr.mxu0 0.0
    %2172 = vmatpush1.msra.mxu0 0.0
    %2173 = vmatprep.subr.mxu0 0.0
    %2174 = vmatpush1.msra.mxu0 0.0
    %2175 = vmatprep.subr.mxu0 0.0
    %2176 = vmatpush1.msra.mxu0 0.0
    %2177 = vmatprep.subr.mxu0 0.0
    %2178 = vmatpush1.msra.mxu0 0.0
    %2179 = vmatprep.subr.mxu0 0.0
    %2180 = vmatpush1.msra.mxu0 0.0
    %2181 = vmatprep.subr.mxu0 0.0
    %2182 = vmatpush1.msra.mxu0 0.0
    %2183 = vmatprep.subr.mxu0 0.0
    %2184 = vmatpush1.msra.mxu0 0.0
    %2185 = vmatprep.subr.mxu0 0.0
    %2186 = vmatpush1.msra.mxu0 0.0
    %2187 = vmatprep.subr.mxu0 0.0
    %2188 = vmatpush1.msra.mxu0 0.0
    %2189 = vmatprep.subr.mxu0 0.0
    %2190 = vmatpush1.msra.mxu0 0.0
    %2191 = vmatprep.subr.mxu0 0.0
    %2192 = vmatpush1.msra.mxu0 0.0
    %2193 = vmatprep.subr.mxu0 0.0
    %2194 = vmatpush1.msra.mxu0 0.0
    %2195 = vmatprep.subr.mxu0 0.0
    %2196 = vmatpush1.msra.mxu0 0.0
    %2197 = vmatprep.subr.mxu0 0.0
    %2198 = vmatpush1.msra.mxu0 0.0
    %2199 = vmatprep.subr.mxu0 0.0
    %2200 = vmatpush1.msra.mxu0 0.0
    %2201 = vmatprep.mubr.f32.mxu0 0.0
    %v2202 = vand.u32 %v1669, 4294901760
    %2203 = vmatmul.mubr.f32.gmra.mrb[0].mxu0 %v2202
    %v2204 = vpop.f32.mrb[0].mxu0
    %v2205 = vadd.f32 %v2126, %v2204
    %v2206 = vpop.f32.mrb[0].mxu0
    %2207 = vdwg.mxu0
    %2209 = vrot.lane.b32.xlu0 %v1113, 32
    %v2210 = vpop.permute.xlu0 %2209
    %2213 = vrot.lane.b32.xlu0 %v1659, 64
    %v2214 = vpop.permute.xlu0 %2213
    %2217 = vrot.lane.b32.xlu0 %v2205, 96
    %v2218 = vpop.permute.xlu0 %2217
    %vm2220 = vcmask 261120
    %v2221 = vsel %vm2220, %v567, %v2210
    %v2222 = vsel %vm29, %v2221, %v2214
    %vm2223 = vcmask 785408
    %v2224 = vsel %vm2223, %v2222, %v2218
    %2225 = vst [vmem:[#allocation2] sm:$0xff] %v2224
    // Predicated region
    $region10: #{tpu_custom_call.1} parent=1 // pred_check
      _
    $region11: #{tpu_custom_call.1} parent=1 // pred_check_branch
      %2227 = sbr.rel (0) target = $region13
    $region12: #{tpu_custom_call.1} parent=1 // pred_region
      %s2229 = ssub.s32 128, 128
      %2230 = vsyncadd [#allocation3], %s2229
      %s2232 = sshll.u32 [#allocation2], 4
      %s2233 = int_to_ptr.vmem [resolvable:$true] %s2232
      %2235 = dma.vmem_to_hbm [thread:$0]  %s2233, 128, %s2, [#allocation3]
    $region13: #{tpu_custom_call.1} parent=1 // pred_fallthru
      _
    // Predicated region
    $region14: #{tpu_custom_call.1} parent=1 // pred_check
      _
    $region15: #{tpu_custom_call.1} parent=1 // pred_check_branch
      %2237 = sbr.rel (0) target = $region17
    $region16: #{tpu_custom_call.1} parent=1 // pred_region
      %2238 = dma.done [#allocation3], 128
    $region17: #{tpu_custom_call.1} parent=1 // pred_fallthru
      _
    %2239 = vsyncpa [#allocation3], 1

</llo_original>
